<compile_context>
chip_gen: v5e
topology: v5e:2x2
jax: 0.10.0
libtpu: 0.0.40
codegen_flags: <defaults>
</compile_context>

<pallas_src>
import jax
import jax.numpy as jnp
from jax.experimental import pallas as pl
from jax.experimental.pallas import tpu as pltpu


def _round_up(x, m):
    return (x + m - 1) // m * m


_TM_MAX = 2048  # im2col rows per grid step (bf16 out tile @ C=384: ~1.5 MiB)


def _matmul_bias_relu_kernel(p_ref, w_ref, b_ref, o_ref):
    """One M-tile grid step.

    p_ref : (TM, K)  bf16   im2col patches (K = 9*Cin, unpadded)
    w_ref : (K, C)   bf16   BN-scale-folded conv weight (C padded to 128*k)
    b_ref : (1, C)   f32    folded (conv bias + BN) shift
    o_ref : (TM, C)  bf16   ReLU(patches @ W + bias), f32 accumulation
    """
    acc = jax.lax.dot_general(
        p_ref[...], w_ref[...],
        dimension_numbers=(((1,), (0,)), ((), ())),
        preferred_element_type=jnp.float32,
    )
    o_ref[...] = jnp.maximum(acc + b_ref[...], 0.0).astype(o_ref.dtype)


def _matmul_bias_relu_call(patches, w2, b2, tm):
    """patches: (m_pad, K) bf16; w2: (K, c_pad) bf16; b2: (1, c_pad) f32."""
    m_pad, K = patches.shape
    c_pad = w2.shape[-1]
    assert m_pad % tm == 0 and c_pad % 128 == 0
    return pl.pallas_call(
        _matmul_bias_relu_kernel,
        out_shape=jax.ShapeDtypeStruct((m_pad, c_pad), jnp.bfloat16),
        grid_spec=pltpu.PrefetchScalarGridSpec(
            num_scalar_prefetch=0,
            grid=(m_pad // tm,),
            in_specs=[
                pl.BlockSpec((tm, K), lambda m: (m, 0)),
                pl.BlockSpec((K, c_pad), lambda m: (0, 0)),
                pl.BlockSpec((1, c_pad), lambda m: (0, 0)),
            ],
            out_specs=pl.BlockSpec((tm, c_pad), lambda m: (m, 0)),
        ),
        compiler_params=pltpu.CompilerParams(
            # 1-D parallel grid over M: megacore (v7x) splits the long, even
            # M axis instead of a 3-wide branch axis.
            dimension_semantics=("parallel",)),
    )(patches, w2, b2)


def _im2col_patches(x_nchw, m_pad):
    """NCHW f32 -> (m_pad, 9*Cin) bf16 im2col matrix for a 3x3 SAME conv."""
    # TODO(synk): at production H/W, move im2col + spatial zero-pad inside the
    # kernel (manual halo DMA of NHWC row blocks) to avoid this HBM round trip.
    N, Cin, H, W = x_nchw.shape
    x_nhwc = jnp.transpose(x_nchw, (0, 2, 3, 1)).astype(jnp.bfloat16)
    x_sp = jnp.pad(x_nhwc, ((0, 0), (1, 1), (1, 1), (0, 0)))
    taps = [x_sp[:, ky:ky + H, kx:kx + W, :]
            for ky in range(3) for kx in range(3)]
    patches = jnp.stack(taps, axis=3).reshape(N * H * W, 9 * Cin)
    if m_pad > N * H * W:
        patches = jnp.pad(patches, ((0, m_pad - N * H * W), (0, 0)))
    return patches


def _pack_weight(w_folded_hwio, bias, c_pad):
    """HWIO folded weight -> (9*Cin, c_pad) bf16 matrix + padded f32 bias."""
    kh, kw, cin, cout = w_folded_hwio.shape
    w2 = w_folded_hwio.reshape(kh * kw * cin, cout)
    w2 = jnp.pad(w2, ((0, 0), (0, c_pad - cout)))
    b2 = jnp.pad(bias, ((0, c_pad - cout),)).reshape(1, c_pad)
    return w2.astype(jnp.bfloat16), b2.astype(jnp.float32)


def _branch_forward(x_nchw, w_folded_hwio, bias):
    """One Conv2d(3x3, SAME) + folded-BN bias + ReLU branch. NCHW in/out, f32."""
    N, Cin, H, W = x_nchw.shape
    M = N * H * W
    cout = w_folded_hwio.shape[-1]
    c_pad = _round_up(cout, 128)          # per-branch padding: 384 / 256 / 128
    tm = min(_round_up(M, 16), _TM_MAX)   # bf16 sublane packing -> multiple of 16
    m_pad = _round_up(M, tm)

    patches = _im2col_patches(x_nchw, m_pad)          # (m_pad, 9*Cin) bf16
    w2, b2 = _pack_weight(w_folded_hwio, bias, c_pad)  # (9*Cin, c_pad), (1, c_pad)

    slab = _matmul_bias_relu_call(patches, w2, b2, tm)  # (m_pad, c_pad) bf16

    # Final user-facing cast to f32 fused into the NHWC->NCHW epilogue.
    # TODO(synk): have downstream consume NHWC (or write NCHW from the kernel)
    # to drop this extra read+write of the output.
    y = slab[:M, :cout].astype(jnp.float32).reshape(N, H, W, cout)
    return jnp.transpose(y, (0, 3, 1, 2))


def guided_refinement_forward(d4, d3, d2, params):
    """Inputs NCHW f32; params = ((w_folded_hwio, bias), ...) for conv_d4/d3/d2.

    Returns NCHW f32 outputs matching the PyTorch module's forward (eval BN).
    """
    outs = []
    for x, (w, b) in zip((d4, d3, d2), params):
        outs.append(_branch_forward(x, w, b))
    return tuple(outs)


def make_branch_params(key, in_d, out_d, eps=1e-5):
    """Deterministic Conv2d(in_d,out_d,3) + BatchNorm2d(out_d) params (eval mode),
    with the BN scale folded into the conv weight (y = conv(x, w*s) + bias)."""
    k_w, k_b, k_g, k_be, k_m, k_v = jax.random.split(key, 6)
    w_hwio = jax.random.normal(k_w, (3, 3, in_d, out_d), jnp.float32) * 0.1
    conv_b = jax.random.normal(k_b, (out_d,), jnp.float32) * 0.1
    gamma = 1.0 + 0.1 * jax.random.normal(k_g, (out_d,), jnp.float32)
    beta = 0.1 * jax.random.normal(k_be, (out_d,), jnp.float32)
    run_mean = 0.1 * jax.random.normal(k_m, (out_d,), jnp.float32)
    run_var = jnp.abs(1.0 + 0.1 * jax.random.normal(k_v, (out_d,), jnp.float32))
    scale = gamma / jnp.sqrt(run_var + eps)          # BN eval-mode scale
    w_folded = w_hwio * scale[None, None, None, :]   # fold scale into conv weight
    bias = (conv_b - run_mean) * scale + beta        # folded shift
    return w_folded, bias


def ref_branch(x_nchw, w_folded_hwio, bias):
    """Plain-XLA reference matching the kernel's datapath:
    bf16 operands, f32 accumulation, bf16 output rounding."""
    x_nhwc = jnp.transpose(x_nchw, (0, 2, 3, 1)).astype(jnp.bfloat16)
    y = jax.lax.conv_general_dilated(
        x_nhwc, w_folded_hwio.astype(jnp.bfloat16),
        window_strides=(1, 1), padding="SAME",
        dimension_numbers=("NHWC", "HWIO", "NHWC"),
        preferred_element_type=jnp.float32)
    y = jnp.maximum(y + bias.reshape(1, 1, 1, -1), 0.0)
    y = y.astype(jnp.bfloat16).astype(jnp.float32)
    return jnp.transpose(y, (0, 3, 1, 2))


if __name__ == "__main__":
    key = jax.random.PRNGKey(0)
    in_d = 4
    N, H, W = 2, 16, 16

    k_in, k_p4, k_p3, k_p2 = jax.random.split(key, 4)
    k4, k3, k2 = jax.random.split(k_in, 3)
    # NCHW inputs (PyTorch convention)
    d4 = jax.random.normal(k4, (N, in_d, H, W), jnp.float32)
    d3 = jax.random.normal(k3, (N, in_d, H, W), jnp.float32)
    d2 = jax.random.normal(k2, (N, in_d, H, W), jnp.float32)

    params = (
        make_branch_params(k_p4, in_d, 384),  # conv_d4
        make_branch_params(k_p3, in_d, 192),  # conv_d3
        make_branch_params(k_p2, in_d, 96),   # conv_d2
    )

    fwd = jax.jit(guided_refinement_forward)
    out4, out3, out2 = fwd(d4, d3, d2, params)
    jax.block_until_ready((out4, out3, out2))

    assert out4.shape == (N, 384, H, W)
    assert out3.shape == (N, 192, H, W)
    assert out2.shape == (N, 96, H, W)

    # Correctness check vs. a plain-XLA conv reference with the same
    # bf16-operand / f32-accumulate / bf16-output datapath.
    for x, (w, b), y in zip((d4, d3, d2), params, (out4, out3, out2)):
        ref = ref_branch(x, w, b)
        assert jnp.allclose(y, ref, atol=2e-2, rtol=2e-2), "mismatch vs reference"

    print("KERNEL_OK")
</pallas_src>

<mosaic_0001>
module attributes {stable_mosaic.version = 11 : i64} {
  func.func @_matmul_bias_relu_kernel(%arg0: i32, %arg1: memref<512x36xbf16, #tpu.memory_space<vmem>>, %arg2: memref<36x384xbf16, #tpu.memory_space<vmem>>, %arg3: memref<1x384xf32, #tpu.memory_space<vmem>>, %arg4: memref<512x384xbf16, #tpu.memory_space<vmem>>) attributes {dimension_semantics = [#tpu.dimension_semantics<parallel>], iteration_bounds = array<i64: 1>, scalar_prefetch = 0 : i64, scratch_operands = 0 : i64, tpu.core_type = #tpu.core_type<tc>, window_params = [{transform_indices = @transform_0, window_bounds = array<i64: 512, 36>}, {pipeline_mode = #tpu.pipeline_mode<synchronous>, transform_indices = @transform_1, window_bounds = array<i64: 36, 384>}, {pipeline_mode = #tpu.pipeline_mode<synchronous>, transform_indices = @transform_2, window_bounds = array<i64: 1, 384>}, {transform_indices = @transform_3, window_bounds = array<i64: 512, 384>}]} {
    %c0 = arith.constant 0 : index
    %c0_0 = arith.constant 0 : index
    %0 = vector.load %arg1[%c0, %c0_0] : memref<512x36xbf16, #tpu.memory_space<vmem>>, vector<512x36xbf16>
    %c0_1 = arith.constant 0 : index
    %c0_2 = arith.constant 0 : index
    %1 = vector.load %arg2[%c0_1, %c0_2] : memref<36x384xbf16, #tpu.memory_space<vmem>>, vector<36x384xbf16>
    %cst = arith.constant dense<0.000000e+00> : vector<512x384xf32>
    %2 = tpu.matmul %0, %1, %cst {dimension_numbers = #tpu.dot_dimension_numbers<[1], [0], [0], [1], [0, 0, 1, 1], [], []>} : vector<512x36xbf16>, vector<36x384xbf16>, vector<512x384xf32> -> vector<512x384xf32>
    %c0_3 = arith.constant 0 : index
    %c0_4 = arith.constant 0 : index
    %3 = vector.load %arg3[%c0_3, %c0_4] : memref<1x384xf32, #tpu.memory_space<vmem>>, vector<1x384xf32>
    %4 = vector.broadcast %3 : vector<1x384xf32> to vector<512x384xf32>
    %5 = arith.addf %2, %4 : vector<512x384xf32>
    %cst_5 = arith.constant 0.000000e+00 : f32
    %6 = vector.broadcast %cst_5 : f32 to vector<512x384xf32>
    %7 = arith.maximumf %5, %6 : vector<512x384xf32>
    %8 = arith.truncf %7 : vector<512x384xf32> to vector<512x384xbf16>
    %c0_6 = arith.constant 0 : index
    %c0_7 = arith.constant 0 : index
    %9 = vector.load %arg4[%c0_6, %c0_7] : memref<512x384xbf16, #tpu.memory_space<vmem>>, vector<512x384xbf16>
    tpu.vector_store %arg4[%c0_6, %c0_7], %8 {strides = array<i32>} : memref<512x384xbf16, #tpu.memory_space<vmem>>, vector<512x384xbf16>,
    return
  }
  func.func @transform_0(%arg0: i32) -> (i32, i32) {
    %c0_i32 = arith.constant 0 : i32
    %c0_i32_0 = arith.constant 0 : i32
    return %arg0, %c0_i32 : i32, i32
  }
  func.func @transform_1(%arg0: i32) -> (i32, i32) {
    %c0_i32 = arith.constant 0 : i32
    %c0_i32_0 = arith.constant 0 : i32
    %c0_i32_1 = arith.constant 0 : i32
    return %c0_i32, %c0_i32_0 : i32, i32
  }
  func.func @transform_2(%arg0: i32) -> (i32, i32) {
    %c0_i32 = arith.constant 0 : i32
    %c0_i32_0 = arith.constant 0 : i32
    %c0_i32_1 = arith.constant 0 : i32
    return %c0_i32, %c0_i32_0 : i32, i32
  }
  func.func @transform_3(%arg0: i32) -> (i32, i32) {
    %c0_i32 = arith.constant 0 : i32
    %c0_i32_0 = arith.constant 0 : i32
    return %arg0, %c0_i32 : i32, i32
  }
}

module attributes {stable_mosaic.version = 11 : i64} {
  func.func @_matmul_bias_relu_kernel(%arg0: i32, %arg1: memref<512x36xbf16, #tpu.memory_space<vmem>>, %arg2: memref<36x256xbf16, #tpu.memory_space<vmem>>, %arg3: memref<1x256xf32, #tpu.memory_space<vmem>>, %arg4: memref<512x256xbf16, #tpu.memory_space<vmem>>) attributes {dimension_semantics = [#tpu.dimension_semantics<parallel>], iteration_bounds = array<i64: 1>, scalar_prefetch = 0 : i64, scratch_operands = 0 : i64, tpu.core_type = #tpu.core_type<tc>, window_params = [{transform_indices = @transform_0, window_bounds = array<i64: 512, 36>}, {pipeline_mode = #tpu.pipeline_mode<synchronous>, transform_indices = @transform_1, window_bounds = array<i64: 36, 256>}, {pipeline_mode = #tpu.pipeline_mode<synchronous>, transform_indices = @transform_2, window_bounds = array<i64: 1, 256>}, {transform_indices = @transform_3, window_bounds = array<i64: 512, 256>}]} {
    %c0 = arith.constant 0 : index
    %c0_0 = arith.constant 0 : index
    %0 = vector.load %arg1[%c0, %c0_0] : memref<512x36xbf16, #tpu.memory_space<vmem>>, vector<512x36xbf16>
    %c0_1 = arith.constant 0 : index
    %c0_2 = arith.constant 0 : index
    %1 = vector.load %arg2[%c0_1, %c0_2] : memref<36x256xbf16, #tpu.memory_space<vmem>>, vector<36x256xbf16>
    %cst = arith.constant dense<0.000000e+00> : vector<512x256xf32>
    %2 = tpu.matmul %0, %1, %cst {dimension_numbers = #tpu.dot_dimension_numbers<[1], [0], [0], [1], [0, 0, 1, 1], [], []>} : vector<512x36xbf16>, vector<36x256xbf16>, vector<512x256xf32> -> vector<512x256xf32>
    %c0_3 = arith.constant 0 : index
    %c0_4 = arith.constant 0 : index
    %3 = vector.load %arg3[%c0_3, %c0_4] : memref<1x256xf32, #tpu.memory_space<vmem>>, vector<1x256xf32>
    %4 = vector.broadcast %3 : vector<1x256xf32> to vector<512x256xf32>
    %5 = arith.addf %2, %4 : vector<512x256xf32>
    %cst_5 = arith.constant 0.000000e+00 : f32
    %6 = vector.broadcast %cst_5 : f32 to vector<512x256xf32>
    %7 = arith.maximumf %5, %6 : vector<512x256xf32>
    %8 = arith.truncf %7 : vector<512x256xf32> to vector<512x256xbf16>
    %c0_6 = arith.constant 0 : index
    %c0_7 = arith.constant 0 : index
    %9 = vector.load %arg4[%c0_6, %c0_7] : memref<512x256xbf16, #tpu.memory_space<vmem>>, vector<512x256xbf16>
    tpu.vector_store %arg4[%c0_6, %c0_7], %8 {strides = array<i32>} : memref<512x256xbf16, #tpu.memory_space<vmem>>, vector<512x256xbf16>,
    return
  }
  func.func @transform_0(%arg0: i32) -> (i32, i32) {
    %c0_i32 = arith.constant 0 : i32
    %c0_i32_0 = arith.constant 0 : i32
    return %arg0, %c0_i32 : i32, i32
  }
  func.func @transform_1(%arg0: i32) -> (i32, i32) {
    %c0_i32 = arith.constant 0 : i32
    %c0_i32_0 = arith.constant 0 : i32
    %c0_i32_1 = arith.constant 0 : i32
    return %c0_i32, %c0_i32_0 : i32, i32
  }
  func.func @transform_2(%arg0: i32) -> (i32, i32) {
    %c0_i32 = arith.constant 0 : i32
    %c0_i32_0 = arith.constant 0 : i32
    %c0_i32_1 = arith.constant 0 : i32
    return %c0_i32, %c0_i32_0 : i32, i32
  }
  func.func @transform_3(%arg0: i32) -> (i32, i32) {
    %c0_i32 = arith.constant 0 : i32
    %c0_i32_0 = arith.constant 0 : i32
    return %arg0, %c0_i32 : i32, i32
  }
}

module attributes {stable_mosaic.version = 11 : i64} {
  func.func @_matmul_bias_relu_kernel(%arg0: i32, %arg1: memref<512x36xbf16, #tpu.memory_space<vmem>>, %arg2: memref<36x128xbf16, #tpu.memory_space<vmem>>, %arg3: memref<1x128xf32, #tpu.memory_space<vmem>>, %arg4: memref<512x128xbf16, #tpu.memory_space<vmem>>) attributes {dimension_semantics = [#tpu.dimension_semantics<parallel>], iteration_bounds = array<i64: 1>, scalar_prefetch = 0 : i64, scratch_operands = 0 : i64, tpu.core_type = #tpu.core_type<tc>, window_params = [{transform_indices = @transform_0, window_bounds = array<i64: 512, 36>}, {pipeline_mode = #tpu.pipeline_mode<synchronous>, transform_indices = @transform_1, window_bounds = array<i64: 36, 128>}, {pipeline_mode = #tpu.pipeline_mode<synchronous>, transform_indices = @transform_2, window_bounds = array<i64: 1, 128>}, {transform_indices = @transform_3, window_bounds = array<i64: 512, 128>}]} {
    %c0 = arith.constant 0 : index
    %c0_0 = arith.constant 0 : index
    %0 = vector.load %arg1[%c0, %c0_0] : memref<512x36xbf16, #tpu.memory_space<vmem>>, vector<512x36xbf16>
    %c0_1 = arith.constant 0 : index
    %c0_2 = arith.constant 0 : index
    %1 = vector.load %arg2[%c0_1, %c0_2] : memref<36x128xbf16, #tpu.memory_space<vmem>>, vector<36x128xbf16>
    %cst = arith.constant dense<0.000000e+00> : vector<512x128xf32>
    %2 = tpu.matmul %0, %1, %cst {dimension_numbers = #tpu.dot_dimension_numbers<[1], [0], [0], [1], [0, 0, 1, 1], [], []>} : vector<512x36xbf16>, vector<36x128xbf16>, vector<512x128xf32> -> vector<512x128xf32>
    %c0_3 = arith.constant 0 : index
    %c0_4 = arith.constant 0 : index
    %3 = vector.load %arg3[%c0_3, %c0_4] : memref<1x128xf32, #tpu.memory_space<vmem>>, vector<1x128xf32>
    %4 = vector.broadcast %3 : vector<1x128xf32> to vector<512x128xf32>
    %5 = arith.addf %2, %4 : vector<512x128xf32>
    %cst_5 = arith.constant 0.000000e+00 : f32
    %6 = vector.broadcast %cst_5 : f32 to vector<512x128xf32>
    %7 = arith.maximumf %5, %6 : vector<512x128xf32>
    %8 = arith.truncf %7 : vector<512x128xf32> to vector<512x128xbf16>
    %c0_6 = arith.constant 0 : index
    %c0_7 = arith.constant 0 : index
    %9 = vector.load %arg4[%c0_6, %c0_7] : memref<512x128xbf16, #tpu.memory_space<vmem>>, vector<512x128xbf16>
    tpu.vector_store %arg4[%c0_6, %c0_7], %8 {strides = array<i32>} : memref<512x128xbf16, #tpu.memory_space<vmem>>, vector<512x128xbf16>,
    return
  }
  func.func @transform_0(%arg0: i32) -> (i32, i32) {
    %c0_i32 = arith.constant 0 : i32
    %c0_i32_0 = arith.constant 0 : i32
    return %arg0, %c0_i32 : i32, i32
  }
  func.func @transform_1(%arg0: i32) -> (i32, i32) {
    %c0_i32 = arith.constant 0 : i32
    %c0_i32_0 = arith.constant 0 : i32
    %c0_i32_1 = arith.constant 0 : i32
    return %c0_i32, %c0_i32_0 : i32, i32
  }
  func.func @transform_2(%arg0: i32) -> (i32, i32) {
    %c0_i32 = arith.constant 0 : i32
    %c0_i32_0 = arith.constant 0 : i32
    %c0_i32_1 = arith.constant 0 : i32
    return %c0_i32, %c0_i32_0 : i32, i32
  }
  func.func @transform_3(%arg0: i32) -> (i32, i32) {
    %c0_i32 = arith.constant 0 : i32
    %c0_i32_0 = arith.constant 0 : i32
    return %arg0, %c0_i32 : i32, i32
  }
}

</mosaic_0001>

<llo_original>
// kernel: guided_refinement_forward.4
$region0: #{guided_refinement_forward.4}
  #allocation0 [shape = 'u32[]', space=smem, size = 0x4, offset = 0x4, fixed_abs, tag = 'smem constant byte address 0x4 - core index']
  #allocation1 [shape = 'u32[72,128]{1,0:T(1,128)}', space=vmem, size = 0x9000, scoped, tag = 'internal scratch']
  %s0 = inlined_call_operand.vmem [shape: bf16[512,36], index: 0, kind: input, shape index: {}]
  %s1 = inlined_call_operand.vmem [shape: bf16[36,256], index: 1, kind: input, shape index: {}]
  %s2 = inlined_call_operand.vmem [shape: f32[1,256], index: 2, kind: input, shape index: {}]
  %s3 = inlined_call_operand.vmem [shape: bf16[512,256], index: 3, kind: output, shape index: {}]
  %s4 = sld [smem:[#allocation0]]
  $region22: #{guided_refinement_forward.4} parent=0
    _
  %s6 = ssub.s32 1, %s4
  %s7 = scalar_select 0, %s6, %s4
  // Predicated region
  $region2: #{guided_refinement_forward.4} parent=0 // pred_check
    _
  $region3: #{guided_refinement_forward.4} parent=0 // pred_check_branch
    %9 = sbr.rel (0) target = $region5
  $region4: #{guided_refinement_forward.4} parent=0 // pred_region
    _
  $region5: #{guided_refinement_forward.4} parent=0 // pred_fallthru
    _
  // Predicated region
  $region6: #{guided_refinement_forward.4} parent=0 // pred_check
    _
  $region7: #{guided_refinement_forward.4} parent=0 // pred_check_branch
    %11 = sbr.rel (0) target = $region9
  $region8: #{guided_refinement_forward.4} parent=0 // pred_region
    _
  $region9: #{guided_refinement_forward.4} parent=0 // pred_fallthru
    _
  // Predicated region
  $region10: #{guided_refinement_forward.4} parent=0 // pred_check
    _
  $region11: #{guided_refinement_forward.4} parent=0 // pred_check_branch
    %13 = sbr.rel (0) target = $region13
  $region12: #{guided_refinement_forward.4} parent=0 // pred_region
    _
  $region13: #{guided_refinement_forward.4} parent=0 // pred_fallthru
    _
  %v15 = vld [vmem:[%s0] sm:$0xf]
  %v16 = vld [vmem:[%s0 + $0x4] sm:$0xf]
  %v17 = vld [vmem:[%s0 + $0x8] sm:$0xf]
  %v18 = vld [vmem:[%s0 + $0xc] sm:$0xf]
  %v19 = vld [vmem:[%s0 + $0x10] sm:$0xf]
  %v20 = vld [vmem:[%s0 + $0x14] sm:$0xf]
  %v21 = vld [vmem:[%s0 + $0x18] sm:$0xf]
  %v22 = vld [vmem:[%s0 + $0x1c] sm:$0xf]
  %v23 = vld [vmem:[%s0 + $0x20] sm:$0xf]
  %v24 = vld [vmem:[%s0 + $0x24] sm:$0xf]
  %v25 = vld [vmem:[%s0 + $0x28] sm:$0xf]
  %v26 = vld [vmem:[%s0 + $0x2c] sm:$0xf]
  %v27 = vld [vmem:[%s0 + $0x30] sm:$0xf]
  %v28 = vld [vmem:[%s0 + $0x34] sm:$0xf]
  %v29 = vld [vmem:[%s0 + $0x38] sm:$0xf]
  %v30 = vld [vmem:[%s0 + $0x3c] sm:$0xf]
  %v31 = vld [vmem:[%s0 + $0x40] sm:$0xf]
  %v32 = vld [vmem:[%s0 + $0x44] sm:$0xf]
  %v33 = vld [vmem:[%s0 + $0x48] sm:$0xf]
  %v34 = vld [vmem:[%s0 + $0x4c] sm:$0xf]
  %v35 = vld [vmem:[%s0 + $0x50] sm:$0xf]
  %v36 = vld [vmem:[%s0 + $0x54] sm:$0xf]
  %v37 = vld [vmem:[%s0 + $0x58] sm:$0xf]
  %v38 = vld [vmem:[%s0 + $0x5c] sm:$0xf]
  %v39 = vld [vmem:[%s0 + $0x60] sm:$0xf]
  %v40 = vld [vmem:[%s0 + $0x64] sm:$0xf]
  %v41 = vld [vmem:[%s0 + $0x68] sm:$0xf]
  %v42 = vld [vmem:[%s0 + $0x6c] sm:$0xf]
  %v43 = vld [vmem:[%s0 + $0x70] sm:$0xf]
  %v44 = vld [vmem:[%s0 + $0x74] sm:$0xf]
  %v45 = vld [vmem:[%s0 + $0x78] sm:$0xf]
  %v46 = vld [vmem:[%s0 + $0x7c] sm:$0xf]
  %v47 = vld [vmem:[%s0 + $0x80] sm:$0xf]
  %v48 = vld [vmem:[%s0 + $0x84] sm:$0xf]
  %v49 = vld [vmem:[%s0 + $0x88] sm:$0xf]
  %v50 = vld [vmem:[%s0 + $0x8c] sm:$0xf]
  %v51 = vld [vmem:[%s0 + $0x90] sm:$0xf]
  %v52 = vld [vmem:[%s0 + $0x94] sm:$0xf]
  %v53 = vld [vmem:[%s0 + $0x98] sm:$0xf]
  %v54 = vld [vmem:[%s0 + $0x9c] sm:$0xf]
  %v55 = vld [vmem:[%s0 + $0xa0] sm:$0xf]
  %v56 = vld [vmem:[%s0 + $0xa4] sm:$0xf]
  %v57 = vld [vmem:[%s0 + $0xa8] sm:$0xf]
  %v58 = vld [vmem:[%s0 + $0xac] sm:$0xf]
  %v59 = vld [vmem:[%s0 + $0xb0] sm:$0xf]
  %v60 = vld [vmem:[%s0 + $0xb4] sm:$0xf]
  %v61 = vld [vmem:[%s0 + $0xb8] sm:$0xf]
  %v62 = vld [vmem:[%s0 + $0xbc] sm:$0xf]
  %v63 = vld [vmem:[%s0 + $0xc0] sm:$0xf]
  %v64 = vld [vmem:[%s0 + $0xc4] sm:$0xf]
  %v65 = vld [vmem:[%s0 + $0xc8] sm:$0xf]
  %v66 = vld [vmem:[%s0 + $0xcc] sm:$0xf]
  %v67 = vld [vmem:[%s0 + $0xd0] sm:$0xf]
  %v68 = vld [vmem:[%s0 + $0xd4] sm:$0xf]
  %v69 = vld [vmem:[%s0 + $0xd8] sm:$0xf]
  %v70 = vld [vmem:[%s0 + $0xdc] sm:$0xf]
  %v71 = vld [vmem:[%s0 + $0xe0] sm:$0xf]
  %v72 = vld [vmem:[%s0 + $0xe4] sm:$0xf]
  %v73 = vld [vmem:[%s0 + $0xe8] sm:$0xf]
  %v74 = vld [vmem:[%s0 + $0xec] sm:$0xf]
  %v75 = vld [vmem:[%s0 + $0xf0] sm:$0xf]
  %v76 = vld [vmem:[%s0 + $0xf4] sm:$0xf]
  %v77 = vld [vmem:[%s0 + $0xf8] sm:$0xf]
  %v78 = vld [vmem:[%s0 + $0xfc] sm:$0xf]
  %v79 = vld [vmem:[%s1] sm:$0xff]
  %v80 = vld [vmem:[%s1 + $0x8] sm:$0xff]
  %v81 = vld [vmem:[%s1 + $0x10] sm:$0xff]
  %v82 = vld [vmem:[%s1 + $0x18] sm:$0xff]
  %v83 = vld [vmem:[%s1 + $0x20] sm:$0x33]
  %v84 = vld [vmem:[%s2] sm:$0x3]
  %v86 = vperm.slane %v84, 0
  %v87 = vperm.slane %v84, 1
  %v154 = vunpack.c.l.b16 %v15
  %v155 = vunpack.c.l.b16 %v16
  %v156 = vunpack.c.l.b16 %v17
  %v157 = vunpack.c.l.b16 %v18
  %v158 = vunpack.c.l.b16 %v19
  %v159 = vunpack.c.l.b16 %v20
  %v160 = vunpack.c.l.b16 %v21
  %v161 = vunpack.c.l.b16 %v22
  %v162 = vunpack.c.l.b16 %v23
  %v163 = vunpack.c.l.b16 %v24
  %v164 = vunpack.c.l.b16 %v25
  %v165 = vunpack.c.l.b16 %v26
  %v166 = vunpack.c.l.b16 %v27
  %v167 = vunpack.c.l.b16 %v28
  %v168 = vunpack.c.l.b16 %v29
  %v169 = vunpack.c.l.b16 %v30
  %v170 = vunpack.c.l.b16 %v31
  %v171 = vunpack.c.l.b16 %v32
  %v172 = vunpack.c.l.b16 %v33
  %v173 = vunpack.c.l.b16 %v34
  %v174 = vunpack.c.l.b16 %v35
  %v175 = vunpack.c.l.b16 %v36
  %v176 = vunpack.c.l.b16 %v37
  %v177 = vunpack.c.l.b16 %v38
  %v178 = vunpack.c.l.b16 %v39
  %v179 = vunpack.c.l.b16 %v40
  %v180 = vunpack.c.l.b16 %v41
  %v181 = vunpack.c.l.b16 %v42
  %v182 = vunpack.c.l.b16 %v43
  %v183 = vunpack.c.l.b16 %v44
  %v184 = vunpack.c.l.b16 %v45
  %v185 = vunpack.c.l.b16 %v46
  %v186 = vunpack.c.l.b16 %v47
  %v187 = vunpack.c.l.b16 %v48
  %v188 = vunpack.c.l.b16 %v49
  %v189 = vunpack.c.l.b16 %v50
  %v190 = vunpack.c.l.b16 %v51
  %v191 = vunpack.c.l.b16 %v52
  %v192 = vunpack.c.l.b16 %v53
  %v193 = vunpack.c.l.b16 %v54
  %v194 = vunpack.c.l.b16 %v55
  %v195 = vunpack.c.l.b16 %v56
  %v196 = vunpack.c.l.b16 %v57
  %v197 = vunpack.c.l.b16 %v58
  %v198 = vunpack.c.l.b16 %v59
  %v199 = vunpack.c.l.b16 %v60
  %v200 = vunpack.c.l.b16 %v61
  %v201 = vunpack.c.l.b16 %v62
  %v202 = vunpack.c.l.b16 %v63
  %v203 = vunpack.c.l.b16 %v64
  %v204 = vunpack.c.l.b16 %v65
  %v205 = vunpack.c.l.b16 %v66
  %v206 = vunpack.c.l.b16 %v67
  %v207 = vunpack.c.l.b16 %v68
  %v208 = vunpack.c.l.b16 %v69
  %v209 = vunpack.c.l.b16 %v70
  %v210 = vunpack.c.l.b16 %v71
  %v211 = vunpack.c.l.b16 %v72
  %v212 = vunpack.c.l.b16 %v73
  %v213 = vunpack.c.l.b16 %v74
  %v214 = vunpack.c.l.b16 %v75
  %v215 = vunpack.c.l.b16 %v76
  %v216 = vunpack.c.l.b16 %v77
  %v217 = vunpack.c.l.b16 %v78
  %v218 = vpack.c.b16 %v155, %v154
  %v219 = vpack.c.b16 %v157, %v156
  %v220 = vpack.c.b16 %v159, %v158
  %v221 = vpack.c.b16 %v161, %v160
  %v222 = vpack.c.b16 %v163, %v162
  %v223 = vpack.c.b16 %v165, %v164
  %v224 = vpack.c.b16 %v167, %v166
  %v225 = vpack.c.b16 %v169, %v168
  %v226 = vpack.c.b16 %v171, %v170
  %v227 = vpack.c.b16 %v173, %v172
  %v228 = vpack.c.b16 %v175, %v174
  %v229 = vpack.c.b16 %v177, %v176
  %v230 = vpack.c.b16 %v179, %v178
  %v231 = vpack.c.b16 %v181, %v180
  %v232 = vpack.c.b16 %v183, %v182
  %v233 = vpack.c.b16 %v185, %v184
  %v234 = vpack.c.b16 %v187, %v186
  %v235 = vpack.c.b16 %v189, %v188
  %v236 = vpack.c.b16 %v191, %v190
  %v237 = vpack.c.b16 %v193, %v192
  %v238 = vpack.c.b16 %v195, %v194
  %v239 = vpack.c.b16 %v197, %v196
  %v240 = vpack.c.b16 %v199, %v198
  %v241 = vpack.c.b16 %v201, %v200
  %v242 = vpack.c.b16 %v203, %v202
  %v243 = vpack.c.b16 %v205, %v204
  %v244 = vpack.c.b16 %v207, %v206
  %v245 = vpack.c.b16 %v209, %v208
  %v246 = vpack.c.b16 %v211, %v210
  %v247 = vpack.c.b16 %v213, %v212
  %v248 = vpack.c.b16 %v215, %v214
  %v249 = vpack.c.b16 %v217, %v216
  %v255 = vunpack.c.l.b16 %v79
  %v256 = vunpack.c.h.b16 %v79
  %v257 = vunpack.c.l.b16 %v80
  %v258 = vunpack.c.h.b16 %v80
  %v259 = vunpack.c.l.b16 %v81
  %v260 = vunpack.c.h.b16 %v81
  %v261 = vunpack.c.l.b16 %v82
  %v262 = vunpack.c.h.b16 %v82
  %v263 = vunpack.c.l.b16 %v83
  %v264 = vunpack.c.h.b16 %v83
  %v265 = vpack.c.b16 %v257, %v255
  %v266 = vpack.c.b16 %v258, %v256
  %v267 = vpack.c.b16 %v261, %v259
  %v268 = vpack.c.b16 %v262, %v260
  %v269 = vpack.c.b16 %v263, %v263
  %v270 = vpack.c.b16 %v264, %v264
  %vm275 = vcmask 293888
  %v277 = vsel %vm275, %v218, 0
  %v280 = vsel %vm275, %v219, 0
  %v283 = vsel %vm275, %v220, 0
  %v286 = vsel %vm275, %v221, 0
  %v289 = vsel %vm275, %v222, 0
  %v292 = vsel %vm275, %v223, 0
  %v295 = vsel %vm275, %v224, 0
  %v298 = vsel %vm275, %v225, 0
  %v301 = vsel %vm275, %v226, 0
  %v304 = vsel %vm275, %v227, 0
  %v307 = vsel %vm275, %v228, 0
  %v310 = vsel %vm275, %v229, 0
  %v313 = vsel %vm275, %v230, 0
  %v316 = vsel %vm275, %v231, 0
  %v319 = vsel %vm275, %v232, 0
  %v322 = vsel %vm275, %v233, 0
  %v325 = vsel %vm275, %v234, 0
  %v328 = vsel %vm275, %v235, 0
  %v331 = vsel %vm275, %v236, 0
  %v334 = vsel %vm275, %v237, 0
  %v337 = vsel %vm275, %v238, 0
  %v340 = vsel %vm275, %v239, 0
  %v343 = vsel %vm275, %v240, 0
  %v346 = vsel %vm275, %v241, 0
  %v349 = vsel %vm275, %v242, 0
  %v352 = vsel %vm275, %v243, 0
  %v355 = vsel %vm275, %v244, 0
  %v358 = vsel %vm275, %v245, 0
  %v361 = vsel %vm275, %v246, 0
  %v364 = vsel %vm275, %v247, 0
  %v367 = vsel %vm275, %v248, 0
  %v370 = vsel %vm275, %v249, 0
  %vm372 = vcmask 1041408
  %v374 = vsel %vm372, %v269, 0
  %v377 = vsel %vm372, %v270, 0
  %379 = vmatpush.bf16.msra.mxu0 0
  %380 = vmatpush.bf16.msra.mxu0 0
  %381 = vmatpush.bf16.msra.mxu0 0
  %382 = vmatpush.bf16.msra.mxu0 0
  %383 = vmatpush.bf16.msra.mxu0 0
  %384 = vmatpush.bf16.msra.mxu0 %v374
  %385 = vmatpush.bf16.msra.mxu0 %v267
  %386 = vmatpush.bf16.msra.mxu0 %v265
  %387 = vmatmul.bf16.gmra.mxu0 %v277
  %v388 = vpop.f32.mrf.mxu0
  %v389 = vadd.f32 %v86, %v388
  %v390 = vpop.f32.mrf.mxu0
  %v391 = vadd.f32 %v86, %v390
  %392 = vmatmul.bf16.gmra.mxu0 %v280
  %v393 = vpop.f32.mrf.mxu0
  %v394 = vadd.f32 %v86, %v393
  %v395 = vpop.f32.mrf.mxu0
  %v396 = vadd.f32 %v86, %v395
  %397 = vmatmul.bf16.gmra.mxu0 %v283
  %v398 = vpop.f32.mrf.mxu0
  %v399 = vadd.f32 %v86, %v398
  %v400 = vpop.f32.mrf.mxu0
  %v401 = vadd.f32 %v86, %v400
  %402 = vmatmul.bf16.gmra.mxu0 %v286
  %v403 = vpop.f32.mrf.mxu0
  %v404 = vadd.f32 %v86, %v403
  %v405 = vpop.f32.mrf.mxu0
  %v406 = vadd.f32 %v86, %v405
  %407 = vmatmul.bf16.gmra.mxu0 %v289
  %v408 = vpop.f32.mrf.mxu0
  %v409 = vadd.f32 %v86, %v408
  %v410 = vpop.f32.mrf.mxu0
  %v411 = vadd.f32 %v86, %v410
  %412 = vmatmul.bf16.gmra.mxu0 %v292
  %v413 = vpop.f32.mrf.mxu0
  %v414 = vadd.f32 %v86, %v413
  %v415 = vpop.f32.mrf.mxu0
  %v416 = vadd.f32 %v86, %v415
  %417 = vmatmul.bf16.gmra.mxu0 %v295
  %v418 = vpop.f32.mrf.mxu0
  %v419 = vadd.f32 %v86, %v418
  %v420 = vpop.f32.mrf.mxu0
  %v421 = vadd.f32 %v86, %v420
  %422 = vmatmul.bf16.gmra.mxu0 %v298
  %v423 = vpop.f32.mrf.mxu0
  %v424 = vadd.f32 %v86, %v423
  %v425 = vpop.f32.mrf.mxu0
  %v426 = vadd.f32 %v86, %v425
  %427 = vmatmul.bf16.gmra.mxu0 %v301
  %v428 = vpop.f32.mrf.mxu0
  %v429 = vadd.f32 %v86, %v428
  %v430 = vpop.f32.mrf.mxu0
  %v431 = vadd.f32 %v86, %v430
  %432 = vmatmul.bf16.gmra.mxu0 %v304
  %v433 = vpop.f32.mrf.mxu0
  %v434 = vadd.f32 %v86, %v433
  %v435 = vpop.f32.mrf.mxu0
  %v436 = vadd.f32 %v86, %v435
  %437 = vmatmul.bf16.gmra.mxu0 %v307
  %v438 = vpop.f32.mrf.mxu0
  %v439 = vadd.f32 %v86, %v438
  %v440 = vpop.f32.mrf.mxu0
  %v441 = vadd.f32 %v86, %v440
  %442 = vmatmul.bf16.gmra.mxu0 %v310
  %v443 = vpop.f32.mrf.mxu0
  %v444 = vadd.f32 %v86, %v443
  %v445 = vpop.f32.mrf.mxu0
  %v446 = vadd.f32 %v86, %v445
  %447 = vmatmul.bf16.gmra.mxu0 %v313
  %v448 = vpop.f32.mrf.mxu0
  %v449 = vadd.f32 %v86, %v448
  %v450 = vpop.f32.mrf.mxu0
  %v451 = vadd.f32 %v86, %v450
  %452 = vmatmul.bf16.gmra.mxu0 %v316
  %v453 = vpop.f32.mrf.mxu0
  %v454 = vadd.f32 %v86, %v453
  %v455 = vpop.f32.mrf.mxu0
  %v456 = vadd.f32 %v86, %v455
  %457 = vmatmul.bf16.gmra.mxu0 %v319
  %v458 = vpop.f32.mrf.mxu0
  %v459 = vadd.f32 %v86, %v458
  %v460 = vpop.f32.mrf.mxu0
  %v461 = vadd.f32 %v86, %v460
  %462 = vmatmul.bf16.gmra.mxu0 %v322
  %v463 = vpop.f32.mrf.mxu0
  %v464 = vadd.f32 %v86, %v463
  %v465 = vpop.f32.mrf.mxu0
  %v466 = vadd.f32 %v86, %v465
  %467 = vmatmul.bf16.gmra.mxu0 %v325
  %v468 = vpop.f32.mrf.mxu0
  %v469 = vadd.f32 %v86, %v468
  %v470 = vpop.f32.mrf.mxu0
  %v471 = vadd.f32 %v86, %v470
  %472 = vmatmul.bf16.gmra.mxu0 %v328
  %v473 = vpop.f32.mrf.mxu0
  %v474 = vadd.f32 %v86, %v473
  %v475 = vpop.f32.mrf.mxu0
  %v476 = vadd.f32 %v86, %v475
  %477 = vmatmul.bf16.gmra.mxu0 %v331
  %v478 = vpop.f32.mrf.mxu0
  %v479 = vadd.f32 %v86, %v478
  %v480 = vpop.f32.mrf.mxu0
  %v481 = vadd.f32 %v86, %v480
  %482 = vmatmul.bf16.gmra.mxu0 %v334
  %v483 = vpop.f32.mrf.mxu0
  %v484 = vadd.f32 %v86, %v483
  %v485 = vpop.f32.mrf.mxu0
  %v486 = vadd.f32 %v86, %v485
  %487 = vmatmul.bf16.gmra.mxu0 %v337
  %v488 = vpop.f32.mrf.mxu0
  %v489 = vadd.f32 %v86, %v488
  %v490 = vpop.f32.mrf.mxu0
  %v491 = vadd.f32 %v86, %v490
  %492 = vmatmul.bf16.gmra.mxu0 %v340
  %v493 = vpop.f32.mrf.mxu0
  %v494 = vadd.f32 %v86, %v493
  %v495 = vpop.f32.mrf.mxu0
  %v496 = vadd.f32 %v86, %v495
  %497 = vmatmul.bf16.gmra.mxu0 %v343
  %v498 = vpop.f32.mrf.mxu0
  %v499 = vadd.f32 %v86, %v498
  %v500 = vpop.f32.mrf.mxu0
  %v501 = vadd.f32 %v86, %v500
  %502 = vmatmul.bf16.gmra.mxu0 %v346
  %v503 = vpop.f32.mrf.mxu0
  %v504 = vadd.f32 %v86, %v503
  %v505 = vpop.f32.mrf.mxu0
  %v506 = vadd.f32 %v86, %v505
  %507 = vmatmul.bf16.gmra.mxu0 %v349
  %v508 = vpop.f32.mrf.mxu0
  %v509 = vadd.f32 %v86, %v508
  %v510 = vpop.f32.mrf.mxu0
  %v511 = vadd.f32 %v86, %v510
  %512 = vmatmul.bf16.gmra.mxu0 %v352
  %v513 = vpop.f32.mrf.mxu0
  %v514 = vadd.f32 %v86, %v513
  %v515 = vpop.f32.mrf.mxu0
  %v516 = vadd.f32 %v86, %v515
  %517 = vmatmul.bf16.gmra.mxu0 %v355
  %v518 = vpop.f32.mrf.mxu0
  %v519 = vadd.f32 %v86, %v518
  %v520 = vpop.f32.mrf.mxu0
  %v521 = vadd.f32 %v86, %v520
  %522 = vmatmul.bf16.gmra.mxu0 %v358
  %v523 = vpop.f32.mrf.mxu0
  %v524 = vadd.f32 %v86, %v523
  %v525 = vpop.f32.mrf.mxu0
  %v526 = vadd.f32 %v86, %v525
  %527 = vmatmul.bf16.gmra.mxu0 %v361
  %v528 = vpop.f32.mrf.mxu0
  %v529 = vadd.f32 %v86, %v528
  %v530 = vpop.f32.mrf.mxu0
  %v531 = vadd.f32 %v86, %v530
  %532 = vmatmul.bf16.gmra.mxu0 %v364
  %v533 = vpop.f32.mrf.mxu0
  %v534 = vadd.f32 %v86, %v533
  %v535 = vpop.f32.mrf.mxu0
  %v536 = vadd.f32 %v86, %v535
  %537 = vmatmul.bf16.gmra.mxu0 %v367
  %v538 = vpop.f32.mrf.mxu0
  %v539 = vadd.f32 %v86, %v538
  %v540 = vpop.f32.mrf.mxu0
  %v541 = vadd.f32 %v86, %v540
  %542 = vmatmul.bf16.gmra.mxu0 %v370
  %v543 = vpop.f32.mrf.mxu0
  %v544 = vadd.f32 %v86, %v543
  %v545 = vpop.f32.mrf.mxu0
  %v546 = vadd.f32 %v86, %v545
  %547 = vdwg.mxu0
  %548 = vmatpush.bf16.msra.mxu0 0
  %549 = vmatpush.bf16.msra.mxu0 0
  %550 = vmatpush.bf16.msra.mxu0 0
  %551 = vmatpush.bf16.msra.mxu0 0
  %552 = vmatpush.bf16.msra.mxu0 0
  %553 = vmatpush.bf16.msra.mxu0 %v377
  %554 = vmatpush.bf16.msra.mxu0 %v268
  %555 = vmatpush.bf16.msra.mxu0 %v266
  %556 = vmatmul.bf16.gmra.mxu0 %v277
  %v557 = vpop.f32.mrf.mxu0
  %v558 = vadd.f32 %v87, %v557
  %v559 = vpop.f32.mrf.mxu0
  %v560 = vadd.f32 %v87, %v559
  %561 = vmatmul.bf16.gmra.mxu0 %v280
  %v562 = vpop.f32.mrf.mxu0
  %v563 = vadd.f32 %v87, %v562
  %v564 = vpop.f32.mrf.mxu0
  %v565 = vadd.f32 %v87, %v564
  %566 = vmatmul.bf16.gmra.mxu0 %v283
  %v567 = vpop.f32.mrf.mxu0
  %v568 = vadd.f32 %v87, %v567
  %v569 = vpop.f32.mrf.mxu0
  %v570 = vadd.f32 %v87, %v569
  %571 = vmatmul.bf16.gmra.mxu0 %v286
  %v572 = vpop.f32.mrf.mxu0
  %v573 = vadd.f32 %v87, %v572
  %v574 = vpop.f32.mrf.mxu0
  %v575 = vadd.f32 %v87, %v574
  %576 = vmatmul.bf16.gmra.mxu0 %v289
  %v577 = vpop.f32.mrf.mxu0
  %v578 = vadd.f32 %v87, %v577
  %v579 = vpop.f32.mrf.mxu0
  %v580 = vadd.f32 %v87, %v579
  %581 = vmatmul.bf16.gmra.mxu0 %v292
  %v582 = vpop.f32.mrf.mxu0
  %v583 = vadd.f32 %v87, %v582
  %v584 = vpop.f32.mrf.mxu0
  %v585 = vadd.f32 %v87, %v584
  %586 = vmatmul.bf16.gmra.mxu0 %v295
  %v587 = vpop.f32.mrf.mxu0
  %v588 = vadd.f32 %v87, %v587
  %v589 = vpop.f32.mrf.mxu0
  %v590 = vadd.f32 %v87, %v589
  %591 = vmatmul.bf16.gmra.mxu0 %v298
  %v592 = vpop.f32.mrf.mxu0
  %v593 = vadd.f32 %v87, %v592
  %v594 = vpop.f32.mrf.mxu0
  %v595 = vadd.f32 %v87, %v594
  %596 = vmatmul.bf16.gmra.mxu0 %v301
  %v597 = vpop.f32.mrf.mxu0
  %v598 = vadd.f32 %v87, %v597
  %v599 = vpop.f32.mrf.mxu0
  %v600 = vadd.f32 %v87, %v599
  %601 = vmatmul.bf16.gmra.mxu0 %v304
  %v602 = vpop.f32.mrf.mxu0
  %v603 = vadd.f32 %v87, %v602
  %v604 = vpop.f32.mrf.mxu0
  %v605 = vadd.f32 %v87, %v604
  %606 = vmatmul.bf16.gmra.mxu0 %v307
  %v607 = vpop.f32.mrf.mxu0
  %v608 = vadd.f32 %v87, %v607
  %v609 = vpop.f32.mrf.mxu0
  %v610 = vadd.f32 %v87, %v609
  %611 = vmatmul.bf16.gmra.mxu0 %v310
  %v612 = vpop.f32.mrf.mxu0
  %v613 = vadd.f32 %v87, %v612
  %v614 = vpop.f32.mrf.mxu0
  %v615 = vadd.f32 %v87, %v614
  %616 = vmatmul.bf16.gmra.mxu0 %v313
  %v617 = vpop.f32.mrf.mxu0
  %v618 = vadd.f32 %v87, %v617
  %v619 = vpop.f32.mrf.mxu0
  %v620 = vadd.f32 %v87, %v619
  %621 = vmatmul.bf16.gmra.mxu0 %v316
  %v622 = vpop.f32.mrf.mxu0
  %v623 = vadd.f32 %v87, %v622
  %v624 = vpop.f32.mrf.mxu0
  %v625 = vadd.f32 %v87, %v624
  %626 = vmatmul.bf16.gmra.mxu0 %v319
  %v627 = vpop.f32.mrf.mxu0
  %v628 = vadd.f32 %v87, %v627
  %v629 = vpop.f32.mrf.mxu0
  %v630 = vadd.f32 %v87, %v629
  %631 = vmatmul.bf16.gmra.mxu0 %v322
  %v632 = vpop.f32.mrf.mxu0
  %v633 = vadd.f32 %v87, %v632
  %v634 = vpop.f32.mrf.mxu0
  %v635 = vadd.f32 %v87, %v634
  %636 = vmatmul.bf16.gmra.mxu0 %v325
  %v637 = vpop.f32.mrf.mxu0
  %v638 = vadd.f32 %v87, %v637
  %v639 = vpop.f32.mrf.mxu0
  %v640 = vadd.f32 %v87, %v639
  %641 = vmatmul.bf16.gmra.mxu0 %v328
  %v642 = vpop.f32.mrf.mxu0
  %v643 = vadd.f32 %v87, %v642
  %v644 = vpop.f32.mrf.mxu0
  %v645 = vadd.f32 %v87, %v644
  %646 = vmatmul.bf16.gmra.mxu0 %v331
  %v647 = vpop.f32.mrf.mxu0
  %v648 = vadd.f32 %v87, %v647
  %v649 = vpop.f32.mrf.mxu0
  %v650 = vadd.f32 %v87, %v649
  %651 = vmatmul.bf16.gmra.mxu0 %v334
  %v652 = vpop.f32.mrf.mxu0
  %v653 = vadd.f32 %v87, %v652
  %v654 = vpop.f32.mrf.mxu0
  %v655 = vadd.f32 %v87, %v654
  %656 = vmatmul.bf16.gmra.mxu0 %v337
  %v657 = vpop.f32.mrf.mxu0
  %v658 = vadd.f32 %v87, %v657
  %v659 = vpop.f32.mrf.mxu0
  %v660 = vadd.f32 %v87, %v659
  %661 = vmatmul.bf16.gmra.mxu0 %v340
  %v662 = vpop.f32.mrf.mxu0
  %v663 = vadd.f32 %v87, %v662
  %v664 = vpop.f32.mrf.mxu0
  %v665 = vadd.f32 %v87, %v664
  %666 = vmatmul.bf16.gmra.mxu0 %v343
  %v667 = vpop.f32.mrf.mxu0
  %v668 = vadd.f32 %v87, %v667
  %v669 = vpop.f32.mrf.mxu0
  %v670 = vadd.f32 %v87, %v669
  %671 = vmatmul.bf16.gmra.mxu0 %v346
  %v672 = vpop.f32.mrf.mxu0
  %v673 = vadd.f32 %v87, %v672
  %v674 = vpop.f32.mrf.mxu0
  %v675 = vadd.f32 %v87, %v674
  %676 = vmatmul.bf16.gmra.mxu0 %v349
  %v677 = vpop.f32.mrf.mxu0
  %v678 = vadd.f32 %v87, %v677
  %v679 = vpop.f32.mrf.mxu0
  %v680 = vadd.f32 %v87, %v679
  %681 = vmatmul.bf16.gmra.mxu0 %v352
  %v682 = vpop.f32.mrf.mxu0
  %v683 = vadd.f32 %v87, %v682
  %v684 = vpop.f32.mrf.mxu0
  %v685 = vadd.f32 %v87, %v684
  %686 = vmatmul.bf16.gmra.mxu0 %v355
  %v687 = vpop.f32.mrf.mxu0
  %v688 = vadd.f32 %v87, %v687
  %v689 = vpop.f32.mrf.mxu0
  %v690 = vadd.f32 %v87, %v689
  %691 = vmatmul.bf16.gmra.mxu0 %v358
  %v692 = vpop.f32.mrf.mxu0
  %v693 = vadd.f32 %v87, %v692
  %v694 = vpop.f32.mrf.mxu0
  %v695 = vadd.f32 %v87, %v694
  %696 = vmatmul.bf16.gmra.mxu0 %v361
  %v697 = vpop.f32.mrf.mxu0
  %v698 = vadd.f32 %v87, %v697
  %v699 = vpop.f32.mrf.mxu0
  %v700 = vadd.f32 %v87, %v699
  %701 = vmatmul.bf16.gmra.mxu0 %v364
  %v702 = vpop.f32.mrf.mxu0
  %v703 = vadd.f32 %v87, %v702
  %v704 = vpop.f32.mrf.mxu0
  %v705 = vadd.f32 %v87, %v704
  %706 = vmatmul.bf16.gmra.mxu0 %v367
  %v707 = vpop.f32.mrf.mxu0
  %v708 = vadd.f32 %v87, %v707
  %v709 = vpop.f32.mrf.mxu0
  %v710 = vadd.f32 %v87, %v709
  %711 = vmatmul.bf16.gmra.mxu0 %v370
  %v712 = vpop.f32.mrf.mxu0
  %v713 = vadd.f32 %v87, %v712
  %v714 = vpop.f32.mrf.mxu0
  %v715 = vadd.f32 %v87, %v714
  %716 = vdwg.mxu0
  %v717 = vmax.f32 %v389, 0.0
  %v718 = vmax.f32 %v558, 0.0
  %v719 = vmax.f32 %v391, 0.0
  %v720 = vmax.f32 %v560, 0.0
  %v721 = vmax.f32 %v394, 0.0
  %v722 = vmax.f32 %v563, 0.0
  %v723 = vmax.f32 %v396, 0.0
  %v724 = vmax.f32 %v565, 0.0
  %v725 = vmax.f32 %v399, 0.0
  %v726 = vmax.f32 %v568, 0.0
  %v727 = vmax.f32 %v401, 0.0
  %v728 = vmax.f32 %v570, 0.0
  %v729 = vmax.f32 %v404, 0.0
  %v730 = vmax.f32 %v573, 0.0
  %v731 = vmax.f32 %v406, 0.0
  %v732 = vmax.f32 %v575, 0.0
  %v733 = vmax.f32 %v409, 0.0
  %v734 = vmax.f32 %v578, 0.0
  %v735 = vmax.f32 %v411, 0.0
  %v736 = vmax.f32 %v580, 0.0
  %v737 = vmax.f32 %v414, 0.0
  %v738 = vmax.f32 %v583, 0.0
  %v739 = vmax.f32 %v416, 0.0
  %v740 = vmax.f32 %v585, 0.0
  %v741 = vmax.f32 %v419, 0.0
  %v742 = vmax.f32 %v588, 0.0
  %v743 = vmax.f32 %v421, 0.0
  %v744 = vmax.f32 %v590, 0.0
  %v745 = vmax.f32 %v424, 0.0
  %v746 = vmax.f32 %v593, 0.0
  %v747 = vmax.f32 %v426, 0.0
  %v748 = vmax.f32 %v595, 0.0
  %v749 = vmax.f32 %v429, 0.0
  %v750 = vmax.f32 %v598, 0.0
  %v751 = vmax.f32 %v431, 0.0
  %v752 = vmax.f32 %v600, 0.0
  %v753 = vmax.f32 %v434, 0.0
  %v754 = vmax.f32 %v603, 0.0
  %v755 = vmax.f32 %v436, 0.0
  %v756 = vmax.f32 %v605, 0.0
  %v757 = vmax.f32 %v439, 0.0
  %v758 = vmax.f32 %v608, 0.0
  %v759 = vmax.f32 %v441, 0.0
  %v760 = vmax.f32 %v610, 0.0
  %v761 = vmax.f32 %v444, 0.0
  %v762 = vmax.f32 %v613, 0.0
  %v763 = vmax.f32 %v446, 0.0
  %v764 = vmax.f32 %v615, 0.0
  %v765 = vmax.f32 %v449, 0.0
  %v766 = vmax.f32 %v618, 0.0
  %v767 = vmax.f32 %v451, 0.0
  %v768 = vmax.f32 %v620, 0.0
  %v769 = vmax.f32 %v454, 0.0
  %v770 = vmax.f32 %v623, 0.0
  %v771 = vmax.f32 %v456, 0.0
  %v772 = vmax.f32 %v625, 0.0
  %v773 = vmax.f32 %v459, 0.0
  %v774 = vmax.f32 %v628, 0.0
  %v775 = vmax.f32 %v461, 0.0
  %v776 = vmax.f32 %v630, 0.0
  %v777 = vmax.f32 %v464, 0.0
  %v778 = vmax.f32 %v633, 0.0
  %v779 = vmax.f32 %v466, 0.0
  %v780 = vmax.f32 %v635, 0.0
  %v781 = vmax.f32 %v469, 0.0
  %v782 = vmax.f32 %v638, 0.0
  %v783 = vmax.f32 %v471, 0.0
  %v784 = vmax.f32 %v640, 0.0
  %v785 = vmax.f32 %v474, 0.0
  %v786 = vmax.f32 %v643, 0.0
  %v787 = vmax.f32 %v476, 0.0
  %v788 = vmax.f32 %v645, 0.0
  %v789 = vmax.f32 %v479, 0.0
  %v790 = vmax.f32 %v648, 0.0
  %v791 = vmax.f32 %v481, 0.0
  %v792 = vmax.f32 %v650, 0.0
  %v793 = vmax.f32 %v484, 0.0
  %v794 = vmax.f32 %v653, 0.0
  %v795 = vmax.f32 %v486, 0.0
  %v796 = vmax.f32 %v655, 0.0
  %v797 = vmax.f32 %v489, 0.0
  %v798 = vmax.f32 %v658, 0.0
  %v799 = vmax.f32 %v491, 0.0
  %v800 = vmax.f32 %v660, 0.0
  %v801 = vmax.f32 %v494, 0.0
  %v802 = vmax.f32 %v663, 0.0
  %v803 = vmax.f32 %v496, 0.0
  %v804 = vmax.f32 %v665, 0.0
  %v805 = vmax.f32 %v499, 0.0
  %v806 = vmax.f32 %v668, 0.0
  %v807 = vmax.f32 %v501, 0.0
  %v808 = vmax.f32 %v670, 0.0
  %v809 = vmax.f32 %v504, 0.0
  %v810 = vmax.f32 %v673, 0.0
  %v811 = vmax.f32 %v506, 0.0
  %v812 = vmax.f32 %v675, 0.0
  %v813 = vmax.f32 %v509, 0.0
  %v814 = vmax.f32 %v678, 0.0
  %v815 = vmax.f32 %v511, 0.0
  %v816 = vmax.f32 %v680, 0.0
  %v817 = vmax.f32 %v514, 0.0
  %v818 = vmax.f32 %v683, 0.0
  %v819 = vmax.f32 %v516, 0.0
  %v820 = vmax.f32 %v685, 0.0
  %v821 = vmax.f32 %v519, 0.0
  %v822 = vmax.f32 %v688, 0.0
  %v823 = vmax.f32 %v521, 0.0
  %v824 = vmax.f32 %v690, 0.0
  %v825 = vmax.f32 %v524, 0.0
  %v826 = vmax.f32 %v693, 0.0
  %v827 = vmax.f32 %v526, 0.0
  %v828 = vmax.f32 %v695, 0.0
  %v829 = vmax.f32 %v529, 0.0
  %v830 = vmax.f32 %v698, 0.0
  %v831 = vmax.f32 %v531, 0.0
  %v832 = vmax.f32 %v700, 0.0
  %v833 = vmax.f32 %v534, 0.0
  %v834 = vmax.f32 %v703, 0.0
  %v835 = vmax.f32 %v536, 0.0
  %v836 = vmax.f32 %v705, 0.0
  %v837 = vmax.f32 %v539, 0.0
  %v838 = vmax.f32 %v708, 0.0
  %v839 = vmax.f32 %v541, 0.0
  %v840 = vmax.f32 %v710, 0.0
  %v841 = vmax.f32 %v544, 0.0
  %v842 = vmax.f32 %v713, 0.0
  %v843 = vmax.f32 %v546, 0.0
  %v844 = vmax.f32 %v715, 0.0
  %v845 = vpack.c.bf16 %v718, %v717
  %v846 = vpack.c.bf16 %v720, %v719
  %v847 = vpack.c.bf16 %v722, %v721
  %v848 = vpack.c.bf16 %v724, %v723
  %v849 = vpack.c.bf16 %v726, %v725
  %v850 = vpack.c.bf16 %v728, %v727
  %v851 = vpack.c.bf16 %v730, %v729
  %v852 = vpack.c.bf16 %v732, %v731
  %v853 = vpack.c.bf16 %v734, %v733
  %v854 = vpack.c.bf16 %v736, %v735
  %v855 = vpack.c.bf16 %v738, %v737
  %v856 = vpack.c.bf16 %v740, %v739
  %v857 = vpack.c.bf16 %v742, %v741
  %v858 = vpack.c.bf16 %v744, %v743
  %v859 = vpack.c.bf16 %v746, %v745
  %v860 = vpack.c.bf16 %v748, %v747
  %v861 = vpack.c.bf16 %v750, %v749
  %v862 = vpack.c.bf16 %v752, %v751
  %v863 = vpack.c.bf16 %v754, %v753
  %v864 = vpack.c.bf16 %v756, %v755
  %v865 = vpack.c.bf16 %v758, %v757
  %v866 = vpack.c.bf16 %v760, %v759
  %v867 = vpack.c.bf16 %v762, %v761
  %v868 = vpack.c.bf16 %v764, %v763
  %v869 = vpack.c.bf16 %v766, %v765
  %v870 = vpack.c.bf16 %v768, %v767
  %v871 = vpack.c.bf16 %v770, %v769
  %v872 = vpack.c.bf16 %v772, %v771
  %v873 = vpack.c.bf16 %v774, %v773
  %v874 = vpack.c.bf16 %v776, %v775
  %v875 = vpack.c.bf16 %v778, %v777
  %v876 = vpack.c.bf16 %v780, %v779
  %v877 = vpack.c.bf16 %v782, %v781
  %v878 = vpack.c.bf16 %v784, %v783
  %v879 = vpack.c.bf16 %v786, %v785
  %v880 = vpack.c.bf16 %v788, %v787
  %v881 = vpack.c.bf16 %v790, %v789
  %v882 = vpack.c.bf16 %v792, %v791
  %v883 = vpack.c.bf16 %v794, %v793
  %v884 = vpack.c.bf16 %v796, %v795
  %v885 = vpack.c.bf16 %v798, %v797
  %v886 = vpack.c.bf16 %v800, %v799
  %v887 = vpack.c.bf16 %v802, %v801
  %v888 = vpack.c.bf16 %v804, %v803
  %v889 = vpack.c.bf16 %v806, %v805
  %v890 = vpack.c.bf16 %v808, %v807
  %v891 = vpack.c.bf16 %v810, %v809
  %v892 = vpack.c.bf16 %v812, %v811
  %v893 = vpack.c.bf16 %v814, %v813
  %v894 = vpack.c.bf16 %v816, %v815
  %v895 = vpack.c.bf16 %v818, %v817
  %v896 = vpack.c.bf16 %v820, %v819
  %v897 = vpack.c.bf16 %v822, %v821
  %v898 = vpack.c.bf16 %v824, %v823
  %v899 = vpack.c.bf16 %v826, %v825
  %v900 = vpack.c.bf16 %v828, %v827
  %v901 = vpack.c.bf16 %v830, %v829
  %v902 = vpack.c.bf16 %v832, %v831
  %v903 = vpack.c.bf16 %v834, %v833
  %v904 = vpack.c.bf16 %v836, %v835
  %v905 = vpack.c.bf16 %v838, %v837
  %v906 = vpack.c.bf16 %v840, %v839
  %v907 = vpack.c.bf16 %v842, %v841
  %v908 = vpack.c.bf16 %v844, %v843
  %909 = vst [vmem:[%s3] sm:$0xff] %v845
  %910 = vst [vmem:[%s3 + $0x8] sm:$0xff] %v846
  %911 = vst [vmem:[%s3 + $0x10] sm:$0xff] %v847
  %912 = vst [vmem:[%s3 + $0x18] sm:$0xff] %v848
  %913 = vst [vmem:[%s3 + $0x20] sm:$0xff] %v849
  %914 = vst [vmem:[%s3 + $0x28] sm:$0xff] %v850
  %915 = vst [vmem:[%s3 + $0x30] sm:$0xff] %v851
  %916 = vst [vmem:[%s3 + $0x38] sm:$0xff] %v852
  %917 = vst [vmem:[%s3 + $0x40] sm:$0xff] %v853
  %918 = vst [vmem:[%s3 + $0x48] sm:$0xff] %v854
  %919 = vst [vmem:[%s3 + $0x50] sm:$0xff] %v855
  %920 = vst [vmem:[%s3 + $0x58] sm:$0xff] %v856
  %921 = vst [vmem:[%s3 + $0x60] sm:$0xff] %v857
  %922 = vst [vmem:[%s3 + $0x68] sm:$0xff] %v858
  %923 = vst [vmem:[%s3 + $0x70] sm:$0xff] %v859
  %924 = vst [vmem:[%s3 + $0x78] sm:$0xff] %v860
  %925 = vst [vmem:[%s3 + $0x80] sm:$0xff] %v861
  %926 = vst [vmem:[%s3 + $0x88] sm:$0xff] %v862
  %927 = vst [vmem:[%s3 + $0x90] sm:$0xff] %v863
  %928 = vst [vmem:[%s3 + $0x98] sm:$0xff] %v864
  %929 = vst [vmem:[%s3 + $0xa0] sm:$0xff] %v865
  %930 = vst [vmem:[%s3 + $0xa8] sm:$0xff] %v866
  %931 = vst [vmem:[%s3 + $0xb0] sm:$0xff] %v867
  %932 = vst [vmem:[%s3 + $0xb8] sm:$0xff] %v868
  %933 = vst [vmem:[%s3 + $0xc0] sm:$0xff] %v869
  %934 = vst [vmem:[%s3 + $0xc8] sm:$0xff] %v870
  %935 = vst [vmem:[%s3 + $0xd0] sm:$0xff] %v871
  %936 = vst [vmem:[%s3 + $0xd8] sm:$0xff] %v872
  %937 = vst [vmem:[%s3 + $0xe0] sm:$0xff] %v873
  %938 = vst [vmem:[%s3 + $0xe8] sm:$0xff] %v874
  %939 = vst [vmem:[%s3 + $0xf0] sm:$0xff] %v875
  %940 = vst [vmem:[%s3 + $0xf8] sm:$0xff] %v876
  %941 = vst [vmem:[%s3 + $0x100] sm:$0xff] %v877
  %942 = vst [vmem:[%s3 + $0x108] sm:$0xff] %v878
  %943 = vst [vmem:[%s3 + $0x110] sm:$0xff] %v879
  %944 = vst [vmem:[%s3 + $0x118] sm:$0xff] %v880
  %945 = vst [vmem:[%s3 + $0x120] sm:$0xff] %v881
  %946 = vst [vmem:[%s3 + $0x128] sm:$0xff] %v882
  %947 = vst [vmem:[%s3 + $0x130] sm:$0xff] %v883
  %948 = vst [vmem:[%s3 + $0x138] sm:$0xff] %v884
  %949 = vst [vmem:[%s3 + $0x140] sm:$0xff] %v885
  %950 = vst [vmem:[%s3 + $0x148] sm:$0xff] %v886
  %951 = vst [vmem:[%s3 + $0x150] sm:$0xff] %v887
  %952 = vst [vmem:[%s3 + $0x158] sm:$0xff] %v888
  %953 = vst [vmem:[%s3 + $0x160] sm:$0xff] %v889
  %954 = vst [vmem:[%s3 + $0x168] sm:$0xff] %v890
  %955 = vst [vmem:[%s3 + $0x170] sm:$0xff] %v891
  %956 = vst [vmem:[%s3 + $0x178] sm:$0xff] %v892
  %957 = vst [vmem:[%s3 + $0x180] sm:$0xff] %v893
  %958 = vst [vmem:[%s3 + $0x188] sm:$0xff] %v894
  %959 = vst [vmem:[%s3 + $0x190] sm:$0xff] %v895
  %960 = vst [vmem:[%s3 + $0x198] sm:$0xff] %v896
  %961 = vst [vmem:[%s3 + $0x1a0] sm:$0xff] %v897
  %962 = vst [vmem:[%s3 + $0x1a8] sm:$0xff] %v898
  %963 = vst [vmem:[%s3 + $0x1b0] sm:$0xff] %v899
  %964 = vst [vmem:[%s3 + $0x1b8] sm:$0xff] %v900
  %965 = vst [vmem:[%s3 + $0x1c0] sm:$0xff] %v901
  %966 = vst [vmem:[%s3 + $0x1c8] sm:$0xff] %v902
  %967 = vst [vmem:[%s3 + $0x1d0] sm:$0xff] %v903
  %968 = vst [vmem:[%s3 + $0x1d8] sm:$0xff] %v904
  %969 = vst [vmem:[%s3 + $0x1e0] sm:$0xff] %v905
  %970 = vst [vmem:[%s3 + $0x1e8] sm:$0xff] %v906
  %971 = vst [vmem:[%s3 + $0x1f0] sm:$0xff] %v907
  %972 = vst [vmem:[%s3 + $0x1f8] sm:$0xff] %v908
  // Predicated region
  $region14: #{guided_refinement_forward.4} parent=0 // pred_check
    _
  $region15: #{guided_refinement_forward.4} parent=0 // pred_check_branch
    %974 = sbr.rel (0) target = $region17
  $region16: #{guided_refinement_forward.4} parent=0 // pred_region
    _
  $region17: #{guided_refinement_forward.4} parent=0 // pred_fallthru
    _
  // Predicated region
  $region18: #{guided_refinement_forward.4} parent=0 // pred_check
    _
  $region19: #{guided_refinement_forward.4} parent=0 // pred_check_branch
    %976 = sbr.rel (0) target = $region21
  $region20: #{guided_refinement_forward.4} parent=0 // pred_region
    _
  $region21: #{guided_refinement_forward.4} parent=0 // pred_fallthru
    _

// kernel: guided_refinement_forward.3
$region0: #{guided_refinement_forward.3}
  #allocation0 [shape = 'u32[]', space=smem, size = 0x4, offset = 0x4, fixed_abs, tag = 'smem constant byte address 0x4 - core index']
  #allocation1 [shape = 'u32[72,128]{1,0:T(1,128)}', space=vmem, size = 0x9000, scoped, tag = 'internal scratch']
  %s0 = inlined_call_operand.vmem [shape: bf16[512,36], index: 0, kind: input, shape index: {}]
  %s1 = inlined_call_operand.vmem [shape: bf16[36,384], index: 1, kind: input, shape index: {}]
  %s2 = inlined_call_operand.vmem [shape: f32[1,384], index: 2, kind: input, shape index: {}]
  %s3 = inlined_call_operand.vmem [shape: bf16[512,384], index: 3, kind: output, shape index: {}]
  %s4 = sld [smem:[#allocation0]]
  $region22: #{guided_refinement_forward.3} parent=0
    _
  %s6 = ssub.s32 1, %s4
  %s7 = scalar_select 0, %s6, %s4
  // Predicated region
  $region2: #{guided_refinement_forward.3} parent=0 // pred_check
    _
  $region3: #{guided_refinement_forward.3} parent=0 // pred_check_branch
    %9 = sbr.rel (0) target = $region5
  $region4: #{guided_refinement_forward.3} parent=0 // pred_region
    _
  $region5: #{guided_refinement_forward.3} parent=0 // pred_fallthru
    _
  // Predicated region
  $region6: #{guided_refinement_forward.3} parent=0 // pred_check
    _
  $region7: #{guided_refinement_forward.3} parent=0 // pred_check_branch
    %11 = sbr.rel (0) target = $region9
  $region8: #{guided_refinement_forward.3} parent=0 // pred_region
    _
  $region9: #{guided_refinement_forward.3} parent=0 // pred_fallthru
    _
  // Predicated region
  $region10: #{guided_refinement_forward.3} parent=0 // pred_check
    _
  $region11: #{guided_refinement_forward.3} parent=0 // pred_check_branch
    %13 = sbr.rel (0) target = $region13
  $region12: #{guided_refinement_forward.3} parent=0 // pred_region
    _
  $region13: #{guided_refinement_forward.3} parent=0 // pred_fallthru
    _
  %v15 = vld [vmem:[%s0] sm:$0xf]
  %v16 = vld [vmem:[%s0 + $0x4] sm:$0xf]
  %v17 = vld [vmem:[%s0 + $0x8] sm:$0xf]
  %v18 = vld [vmem:[%s0 + $0xc] sm:$0xf]
  %v19 = vld [vmem:[%s0 + $0x10] sm:$0xf]
  %v20 = vld [vmem:[%s0 + $0x14] sm:$0xf]
  %v21 = vld [vmem:[%s0 + $0x18] sm:$0xf]
  %v22 = vld [vmem:[%s0 + $0x1c] sm:$0xf]
  %v23 = vld [vmem:[%s0 + $0x20] sm:$0xf]
  %v24 = vld [vmem:[%s0 + $0x24] sm:$0xf]
  %v25 = vld [vmem:[%s0 + $0x28] sm:$0xf]
  %v26 = vld [vmem:[%s0 + $0x2c] sm:$0xf]
  %v27 = vld [vmem:[%s0 + $0x30] sm:$0xf]
  %v28 = vld [vmem:[%s0 + $0x34] sm:$0xf]
  %v29 = vld [vmem:[%s0 + $0x38] sm:$0xf]
  %v30 = vld [vmem:[%s0 + $0x3c] sm:$0xf]
  %v31 = vld [vmem:[%s0 + $0x40] sm:$0xf]
  %v32 = vld [vmem:[%s0 + $0x44] sm:$0xf]
  %v33 = vld [vmem:[%s0 + $0x48] sm:$0xf]
  %v34 = vld [vmem:[%s0 + $0x4c] sm:$0xf]
  %v35 = vld [vmem:[%s0 + $0x50] sm:$0xf]
  %v36 = vld [vmem:[%s0 + $0x54] sm:$0xf]
  %v37 = vld [vmem:[%s0 + $0x58] sm:$0xf]
  %v38 = vld [vmem:[%s0 + $0x5c] sm:$0xf]
  %v39 = vld [vmem:[%s0 + $0x60] sm:$0xf]
  %v40 = vld [vmem:[%s0 + $0x64] sm:$0xf]
  %v41 = vld [vmem:[%s0 + $0x68] sm:$0xf]
  %v42 = vld [vmem:[%s0 + $0x6c] sm:$0xf]
  %v43 = vld [vmem:[%s0 + $0x70] sm:$0xf]
  %v44 = vld [vmem:[%s0 + $0x74] sm:$0xf]
  %v45 = vld [vmem:[%s0 + $0x78] sm:$0xf]
  %v46 = vld [vmem:[%s0 + $0x7c] sm:$0xf]
  %v47 = vld [vmem:[%s0 + $0x80] sm:$0xf]
  %v48 = vld [vmem:[%s0 + $0x84] sm:$0xf]
  %v49 = vld [vmem:[%s0 + $0x88] sm:$0xf]
  %v50 = vld [vmem:[%s0 + $0x8c] sm:$0xf]
  %v51 = vld [vmem:[%s0 + $0x90] sm:$0xf]
  %v52 = vld [vmem:[%s0 + $0x94] sm:$0xf]
  %v53 = vld [vmem:[%s0 + $0x98] sm:$0xf]
  %v54 = vld [vmem:[%s0 + $0x9c] sm:$0xf]
  %v55 = vld [vmem:[%s0 + $0xa0] sm:$0xf]
  %v56 = vld [vmem:[%s0 + $0xa4] sm:$0xf]
  %v57 = vld [vmem:[%s0 + $0xa8] sm:$0xf]
  %v58 = vld [vmem:[%s0 + $0xac] sm:$0xf]
  %v59 = vld [vmem:[%s0 + $0xb0] sm:$0xf]
  %v60 = vld [vmem:[%s0 + $0xb4] sm:$0xf]
  %v61 = vld [vmem:[%s0 + $0xb8] sm:$0xf]
  %v62 = vld [vmem:[%s0 + $0xbc] sm:$0xf]
  %v63 = vld [vmem:[%s0 + $0xc0] sm:$0xf]
  %v64 = vld [vmem:[%s0 + $0xc4] sm:$0xf]
  %v65 = vld [vmem:[%s0 + $0xc8] sm:$0xf]
  %v66 = vld [vmem:[%s0 + $0xcc] sm:$0xf]
  %v67 = vld [vmem:[%s0 + $0xd0] sm:$0xf]
  %v68 = vld [vmem:[%s0 + $0xd4] sm:$0xf]
  %v69 = vld [vmem:[%s0 + $0xd8] sm:$0xf]
  %v70 = vld [vmem:[%s0 + $0xdc] sm:$0xf]
  %v71 = vld [vmem:[%s0 + $0xe0] sm:$0xf]
  %v72 = vld [vmem:[%s0 + $0xe4] sm:$0xf]
  %v73 = vld [vmem:[%s0 + $0xe8] sm:$0xf]
  %v74 = vld [vmem:[%s0 + $0xec] sm:$0xf]
  %v75 = vld [vmem:[%s0 + $0xf0] sm:$0xf]
  %v76 = vld [vmem:[%s0 + $0xf4] sm:$0xf]
  %v77 = vld [vmem:[%s0 + $0xf8] sm:$0xf]
  %v78 = vld [vmem:[%s0 + $0xfc] sm:$0xf]
  %v79 = vld [vmem:[%s1] sm:$0xff]
  %v80 = vld [vmem:[%s1 + $0x8] sm:$0xf]
  %v81 = vld [vmem:[%s1 + $0xc] sm:$0xff]
  %v82 = vld [vmem:[%s1 + $0x14] sm:$0xf]
  %v83 = vld [vmem:[%s1 + $0x18] sm:$0xff]
  %v84 = vld [vmem:[%s1 + $0x20] sm:$0xf]
  %v85 = vld [vmem:[%s1 + $0x24] sm:$0xff]
  %v86 = vld [vmem:[%s1 + $0x2c] sm:$0xf]
  %v87 = vld [vmem:[%s1 + $0x30] sm:$0x33]
  %v88 = vld [vmem:[%s1 + $0x38] sm:$0x3]
  %v89 = vld [vmem:[%s2] sm:$0x7]
  %v91 = vperm.slane %v89, 0
  %v92 = vperm.slane %v89, 1
  %v93 = vperm.slane %v89, 2
  %v161 = vunpack.c.l.b16 %v15
  %v162 = vunpack.c.l.b16 %v16
  %v163 = vunpack.c.l.b16 %v17
  %v164 = vunpack.c.l.b16 %v18
  %v165 = vunpack.c.l.b16 %v19
  %v166 = vunpack.c.l.b16 %v20
  %v167 = vunpack.c.l.b16 %v21
  %v168 = vunpack.c.l.b16 %v22
  %v169 = vunpack.c.l.b16 %v23
  %v170 = vunpack.c.l.b16 %v24
  %v171 = vunpack.c.l.b16 %v25
  %v172 = vunpack.c.l.b16 %v26
  %v173 = vunpack.c.l.b16 %v27
  %v174 = vunpack.c.l.b16 %v28
  %v175 = vunpack.c.l.b16 %v29
  %v176 = vunpack.c.l.b16 %v30
  %v177 = vunpack.c.l.b16 %v31
  %v178 = vunpack.c.l.b16 %v32
  %v179 = vunpack.c.l.b16 %v33
  %v180 = vunpack.c.l.b16 %v34
  %v181 = vunpack.c.l.b16 %v35
  %v182 = vunpack.c.l.b16 %v36
  %v183 = vunpack.c.l.b16 %v37
  %v184 = vunpack.c.l.b16 %v38
  %v185 = vunpack.c.l.b16 %v39
  %v186 = vunpack.c.l.b16 %v40
  %v187 = vunpack.c.l.b16 %v41
  %v188 = vunpack.c.l.b16 %v42
  %v189 = vunpack.c.l.b16 %v43
  %v190 = vunpack.c.l.b16 %v44
  %v191 = vunpack.c.l.b16 %v45
  %v192 = vunpack.c.l.b16 %v46
  %v193 = vunpack.c.l.b16 %v47
  %v194 = vunpack.c.l.b16 %v48
  %v195 = vunpack.c.l.b16 %v49
  %v196 = vunpack.c.l.b16 %v50
  %v197 = vunpack.c.l.b16 %v51
  %v198 = vunpack.c.l.b16 %v52
  %v199 = vunpack.c.l.b16 %v53
  %v200 = vunpack.c.l.b16 %v54
  %v201 = vunpack.c.l.b16 %v55
  %v202 = vunpack.c.l.b16 %v56
  %v203 = vunpack.c.l.b16 %v57
  %v204 = vunpack.c.l.b16 %v58
  %v205 = vunpack.c.l.b16 %v59
  %v206 = vunpack.c.l.b16 %v60
  %v207 = vunpack.c.l.b16 %v61
  %v208 = vunpack.c.l.b16 %v62
  %v209 = vunpack.c.l.b16 %v63
  %v210 = vunpack.c.l.b16 %v64
  %v211 = vunpack.c.l.b16 %v65
  %v212 = vunpack.c.l.b16 %v66
  %v213 = vunpack.c.l.b16 %v67
  %v214 = vunpack.c.l.b16 %v68
  %v215 = vunpack.c.l.b16 %v69
  %v216 = vunpack.c.l.b16 %v70
  %v217 = vunpack.c.l.b16 %v71
  %v218 = vunpack.c.l.b16 %v72
  %v219 = vunpack.c.l.b16 %v73
  %v220 = vunpack.c.l.b16 %v74
  %v221 = vunpack.c.l.b16 %v75
  %v222 = vunpack.c.l.b16 %v76
  %v223 = vunpack.c.l.b16 %v77
  %v224 = vunpack.c.l.b16 %v78
  %v225 = vpack.c.b16 %v162, %v161
  %v226 = vpack.c.b16 %v164, %v163
  %v227 = vpack.c.b16 %v166, %v165
  %v228 = vpack.c.b16 %v168, %v167
  %v229 = vpack.c.b16 %v170, %v169
  %v230 = vpack.c.b16 %v172, %v171
  %v231 = vpack.c.b16 %v174, %v173
  %v232 = vpack.c.b16 %v176, %v175
  %v233 = vpack.c.b16 %v178, %v177
  %v234 = vpack.c.b16 %v180, %v179
  %v235 = vpack.c.b16 %v182, %v181
  %v236 = vpack.c.b16 %v184, %v183
  %v237 = vpack.c.b16 %v186, %v185
  %v238 = vpack.c.b16 %v188, %v187
  %v239 = vpack.c.b16 %v190, %v189
  %v240 = vpack.c.b16 %v192, %v191
  %v241 = vpack.c.b16 %v194, %v193
  %v242 = vpack.c.b16 %v196, %v195
  %v243 = vpack.c.b16 %v198, %v197
  %v244 = vpack.c.b16 %v200, %v199
  %v245 = vpack.c.b16 %v202, %v201
  %v246 = vpack.c.b16 %v204, %v203
  %v247 = vpack.c.b16 %v206, %v205
  %v248 = vpack.c.b16 %v208, %v207
  %v249 = vpack.c.b16 %v210, %v209
  %v250 = vpack.c.b16 %v212, %v211
  %v251 = vpack.c.b16 %v214, %v213
  %v252 = vpack.c.b16 %v216, %v215
  %v253 = vpack.c.b16 %v218, %v217
  %v254 = vpack.c.b16 %v220, %v219
  %v255 = vpack.c.b16 %v222, %v221
  %v256 = vpack.c.b16 %v224, %v223
  %v267 = vunpack.c.l.b16 %v79
  %v268 = vunpack.c.h.b16 %v79
  %v269 = vunpack.c.l.b16 %v80
  %v270 = vunpack.c.l.b16 %v81
  %v271 = vunpack.c.h.b16 %v81
  %v272 = vunpack.c.l.b16 %v82
  %v273 = vunpack.c.l.b16 %v83
  %v274 = vunpack.c.h.b16 %v83
  %v275 = vunpack.c.l.b16 %v84
  %v276 = vunpack.c.l.b16 %v85
  %v277 = vunpack.c.h.b16 %v85
  %v278 = vunpack.c.l.b16 %v86
  %v279 = vunpack.c.l.b16 %v87
  %v280 = vunpack.c.h.b16 %v87
  %v281 = vunpack.c.l.b16 %v88
  %v282 = vpack.c.b16 %v270, %v267
  %v283 = vpack.c.b16 %v271, %v268
  %v284 = vpack.c.b16 %v272, %v269
  %v285 = vpack.c.b16 %v276, %v273
  %v286 = vpack.c.b16 %v277, %v274
  %v287 = vpack.c.b16 %v278, %v275
  %v288 = vpack.c.b16 %v279, %v279
  %v289 = vpack.c.b16 %v280, %v280
  %v290 = vpack.c.b16 %v281, %v281
  %vm297 = vcmask 293888
  %v299 = vsel %vm297, %v225, 0
  %v302 = vsel %vm297, %v226, 0
  %v305 = vsel %vm297, %v227, 0
  %v308 = vsel %vm297, %v228, 0
  %v311 = vsel %vm297, %v229, 0
  %v314 = vsel %vm297, %v230, 0
  %v317 = vsel %vm297, %v231, 0
  %v320 = vsel %vm297, %v232, 0
  %v323 = vsel %vm297, %v233, 0
  %v326 = vsel %vm297, %v234, 0
  %v329 = vsel %vm297, %v235, 0
  %v332 = vsel %vm297, %v236, 0
  %v335 = vsel %vm297, %v237, 0
  %v338 = vsel %vm297, %v238, 0
  %v341 = vsel %vm297, %v239, 0
  %v344 = vsel %vm297, %v240, 0
  %v347 = vsel %vm297, %v241, 0
  %v350 = vsel %vm297, %v242, 0
  %v353 = vsel %vm297, %v243, 0
  %v356 = vsel %vm297, %v244, 0
  %v359 = vsel %vm297, %v245, 0
  %v362 = vsel %vm297, %v246, 0
  %v365 = vsel %vm297, %v247, 0
  %v368 = vsel %vm297, %v248, 0
  %v371 = vsel %vm297, %v249, 0
  %v374 = vsel %vm297, %v250, 0
  %v377 = vsel %vm297, %v251, 0
  %v380 = vsel %vm297, %v252, 0
  %v383 = vsel %vm297, %v253, 0
  %v386 = vsel %vm297, %v254, 0
  %v389 = vsel %vm297, %v255, 0
  %v392 = vsel %vm297, %v256, 0
  %vm394 = vcmask 1041408
  %v396 = vsel %vm394, %v288, 0
  %v399 = vsel %vm394, %v289, 0
  %v402 = vsel %vm394, %v290, 0
  %404 = vmatpush.bf16.msra.mxu0 0
  %405 = vmatpush.bf16.msra.mxu0 0
  %406 = vmatpush.bf16.msra.mxu0 0
  %407 = vmatpush.bf16.msra.mxu0 0
  %408 = vmatpush.bf16.msra.mxu0 0
  %409 = vmatpush.bf16.msra.mxu0 %v396
  %410 = vmatpush.bf16.msra.mxu0 %v285
  %411 = vmatpush.bf16.msra.mxu0 %v282
  %412 = vmatmul.bf16.gmra.mxu0 %v299
  %v413 = vpop.f32.mrf.mxu0
  %v414 = vadd.f32 %v91, %v413
  %v415 = vpop.f32.mrf.mxu0
  %v416 = vadd.f32 %v91, %v415
  %417 = vmatmul.bf16.gmra.mxu0 %v302
  %v418 = vpop.f32.mrf.mxu0
  %v419 = vadd.f32 %v91, %v418
  %v420 = vpop.f32.mrf.mxu0
  %v421 = vadd.f32 %v91, %v420
  %422 = vmatmul.bf16.gmra.mxu0 %v305
  %v423 = vpop.f32.mrf.mxu0
  %v424 = vadd.f32 %v91, %v423
  %v425 = vpop.f32.mrf.mxu0
  %v426 = vadd.f32 %v91, %v425
  %427 = vmatmul.bf16.gmra.mxu0 %v308
  %v428 = vpop.f32.mrf.mxu0
  %v429 = vadd.f32 %v91, %v428
  %v430 = vpop.f32.mrf.mxu0
  %v431 = vadd.f32 %v91, %v430
  %432 = vmatmul.bf16.gmra.mxu0 %v311
  %v433 = vpop.f32.mrf.mxu0
  %v434 = vadd.f32 %v91, %v433
  %v435 = vpop.f32.mrf.mxu0
  %v436 = vadd.f32 %v91, %v435
  %437 = vmatmul.bf16.gmra.mxu0 %v314
  %v438 = vpop.f32.mrf.mxu0
  %v439 = vadd.f32 %v91, %v438
  %v440 = vpop.f32.mrf.mxu0
  %v441 = vadd.f32 %v91, %v440
  %442 = vmatmul.bf16.gmra.mxu0 %v317
  %v443 = vpop.f32.mrf.mxu0
  %v444 = vadd.f32 %v91, %v443
  %v445 = vpop.f32.mrf.mxu0
  %v446 = vadd.f32 %v91, %v445
  %447 = vmatmul.bf16.gmra.mxu0 %v320
  %v448 = vpop.f32.mrf.mxu0
  %v449 = vadd.f32 %v91, %v448
  %v450 = vpop.f32.mrf.mxu0
  %v451 = vadd.f32 %v91, %v450
  %452 = vmatmul.bf16.gmra.mxu0 %v323
  %v453 = vpop.f32.mrf.mxu0
  %v454 = vadd.f32 %v91, %v453
  %v455 = vpop.f32.mrf.mxu0
  %v456 = vadd.f32 %v91, %v455
  %457 = vmatmul.bf16.gmra.mxu0 %v326
  %v458 = vpop.f32.mrf.mxu0
  %v459 = vadd.f32 %v91, %v458
  %v460 = vpop.f32.mrf.mxu0
  %v461 = vadd.f32 %v91, %v460
  %462 = vmatmul.bf16.gmra.mxu0 %v329
  %v463 = vpop.f32.mrf.mxu0
  %v464 = vadd.f32 %v91, %v463
  %v465 = vpop.f32.mrf.mxu0
  %v466 = vadd.f32 %v91, %v465
  %467 = vmatmul.bf16.gmra.mxu0 %v332
  %v468 = vpop.f32.mrf.mxu0
  %v469 = vadd.f32 %v91, %v468
  %v470 = vpop.f32.mrf.mxu0
  %v471 = vadd.f32 %v91, %v470
  %472 = vmatmul.bf16.gmra.mxu0 %v335
  %v473 = vpop.f32.mrf.mxu0
  %v474 = vadd.f32 %v91, %v473
  %v475 = vpop.f32.mrf.mxu0
  %v476 = vadd.f32 %v91, %v475
  %477 = vmatmul.bf16.gmra.mxu0 %v338
  %v478 = vpop.f32.mrf.mxu0
  %v479 = vadd.f32 %v91, %v478
  %v480 = vpop.f32.mrf.mxu0
  %v481 = vadd.f32 %v91, %v480
  %482 = vmatmul.bf16.gmra.mxu0 %v341
  %v483 = vpop.f32.mrf.mxu0
  %v484 = vadd.f32 %v91, %v483
  %v485 = vpop.f32.mrf.mxu0
  %v486 = vadd.f32 %v91, %v485
  %487 = vmatmul.bf16.gmra.mxu0 %v344
  %v488 = vpop.f32.mrf.mxu0
  %v489 = vadd.f32 %v91, %v488
  %v490 = vpop.f32.mrf.mxu0
  %v491 = vadd.f32 %v91, %v490
  %492 = vmatmul.bf16.gmra.mxu0 %v347
  %v493 = vpop.f32.mrf.mxu0
  %v494 = vadd.f32 %v91, %v493
  %v495 = vpop.f32.mrf.mxu0
  %v496 = vadd.f32 %v91, %v495
  %497 = vmatmul.bf16.gmra.mxu0 %v350
  %v498 = vpop.f32.mrf.mxu0
  %v499 = vadd.f32 %v91, %v498
  %v500 = vpop.f32.mrf.mxu0
  %v501 = vadd.f32 %v91, %v500
  %502 = vmatmul.bf16.gmra.mxu0 %v353
  %v503 = vpop.f32.mrf.mxu0
  %v504 = vadd.f32 %v91, %v503
  %v505 = vpop.f32.mrf.mxu0
  %v506 = vadd.f32 %v91, %v505
  %507 = vmatmul.bf16.gmra.mxu0 %v356
  %v508 = vpop.f32.mrf.mxu0
  %v509 = vadd.f32 %v91, %v508
  %v510 = vpop.f32.mrf.mxu0
  %v511 = vadd.f32 %v91, %v510
  %512 = vmatmul.bf16.gmra.mxu0 %v359
  %v513 = vpop.f32.mrf.mxu0
  %v514 = vadd.f32 %v91, %v513
  %v515 = vpop.f32.mrf.mxu0
  %v516 = vadd.f32 %v91, %v515
  %517 = vmatmul.bf16.gmra.mxu0 %v362
  %v518 = vpop.f32.mrf.mxu0
  %v519 = vadd.f32 %v91, %v518
  %v520 = vpop.f32.mrf.mxu0
  %v521 = vadd.f32 %v91, %v520
  %522 = vmatmul.bf16.gmra.mxu0 %v365
  %v523 = vpop.f32.mrf.mxu0
  %v524 = vadd.f32 %v91, %v523
  %v525 = vpop.f32.mrf.mxu0
  %v526 = vadd.f32 %v91, %v525
  %527 = vmatmul.bf16.gmra.mxu0 %v368
  %v528 = vpop.f32.mrf.mxu0
  %v529 = vadd.f32 %v91, %v528
  %v530 = vpop.f32.mrf.mxu0
  %v531 = vadd.f32 %v91, %v530
  %532 = vmatmul.bf16.gmra.mxu0 %v371
  %v533 = vpop.f32.mrf.mxu0
  %v534 = vadd.f32 %v91, %v533
  %v535 = vpop.f32.mrf.mxu0
  %v536 = vadd.f32 %v91, %v535
  %537 = vmatmul.bf16.gmra.mxu0 %v374
  %v538 = vpop.f32.mrf.mxu0
  %v539 = vadd.f32 %v91, %v538
  %v540 = vpop.f32.mrf.mxu0
  %v541 = vadd.f32 %v91, %v540
  %542 = vmatmul.bf16.gmra.mxu0 %v377
  %v543 = vpop.f32.mrf.mxu0
  %v544 = vadd.f32 %v91, %v543
  %v545 = vpop.f32.mrf.mxu0
  %v546 = vadd.f32 %v91, %v545
  %547 = vmatmul.bf16.gmra.mxu0 %v380
  %v548 = vpop.f32.mrf.mxu0
  %v549 = vadd.f32 %v91, %v548
  %v550 = vpop.f32.mrf.mxu0
  %v551 = vadd.f32 %v91, %v550
  %552 = vmatmul.bf16.gmra.mxu0 %v383
  %v553 = vpop.f32.mrf.mxu0
  %v554 = vadd.f32 %v91, %v553
  %v555 = vpop.f32.mrf.mxu0
  %v556 = vadd.f32 %v91, %v555
  %557 = vmatmul.bf16.gmra.mxu0 %v386
  %v558 = vpop.f32.mrf.mxu0
  %v559 = vadd.f32 %v91, %v558
  %v560 = vpop.f32.mrf.mxu0
  %v561 = vadd.f32 %v91, %v560
  %562 = vmatmul.bf16.gmra.mxu0 %v389
  %v563 = vpop.f32.mrf.mxu0
  %v564 = vadd.f32 %v91, %v563
  %v565 = vpop.f32.mrf.mxu0
  %v566 = vadd.f32 %v91, %v565
  %567 = vmatmul.bf16.gmra.mxu0 %v392
  %v568 = vpop.f32.mrf.mxu0
  %v569 = vadd.f32 %v91, %v568
  %v570 = vpop.f32.mrf.mxu0
  %v571 = vadd.f32 %v91, %v570
  %572 = vdwg.mxu0
  %573 = vmatpush.bf16.msra.mxu0 0
  %574 = vmatpush.bf16.msra.mxu0 0
  %575 = vmatpush.bf16.msra.mxu0 0
  %576 = vmatpush.bf16.msra.mxu0 0
  %577 = vmatpush.bf16.msra.mxu0 0
  %578 = vmatpush.bf16.msra.mxu0 %v399
  %579 = vmatpush.bf16.msra.mxu0 %v286
  %580 = vmatpush.bf16.msra.mxu0 %v283
  %581 = vmatmul.bf16.gmra.mxu0 %v299
  %v582 = vpop.f32.mrf.mxu0
  %v583 = vadd.f32 %v92, %v582
  %v584 = vpop.f32.mrf.mxu0
  %v585 = vadd.f32 %v92, %v584
  %586 = vmatmul.bf16.gmra.mxu0 %v302
  %v587 = vpop.f32.mrf.mxu0
  %v588 = vadd.f32 %v92, %v587
  %v589 = vpop.f32.mrf.mxu0
  %v590 = vadd.f32 %v92, %v589
  %591 = vmatmul.bf16.gmra.mxu0 %v305
  %v592 = vpop.f32.mrf.mxu0
  %v593 = vadd.f32 %v92, %v592
  %v594 = vpop.f32.mrf.mxu0
  %v595 = vadd.f32 %v92, %v594
  %596 = vmatmul.bf16.gmra.mxu0 %v308
  %v597 = vpop.f32.mrf.mxu0
  %v598 = vadd.f32 %v92, %v597
  %v599 = vpop.f32.mrf.mxu0
  %v600 = vadd.f32 %v92, %v599
  %601 = vmatmul.bf16.gmra.mxu0 %v311
  %v602 = vpop.f32.mrf.mxu0
  %v603 = vadd.f32 %v92, %v602
  %v604 = vpop.f32.mrf.mxu0
  %v605 = vadd.f32 %v92, %v604
  %606 = vmatmul.bf16.gmra.mxu0 %v314
  %v607 = vpop.f32.mrf.mxu0
  %v608 = vadd.f32 %v92, %v607
  %v609 = vpop.f32.mrf.mxu0
  %v610 = vadd.f32 %v92, %v609
  %611 = vmatmul.bf16.gmra.mxu0 %v317
  %v612 = vpop.f32.mrf.mxu0
  %v613 = vadd.f32 %v92, %v612
  %v614 = vpop.f32.mrf.mxu0
  %v615 = vadd.f32 %v92, %v614
  %616 = vmatmul.bf16.gmra.mxu0 %v320
  %v617 = vpop.f32.mrf.mxu0
  %v618 = vadd.f32 %v92, %v617
  %v619 = vpop.f32.mrf.mxu0
  %v620 = vadd.f32 %v92, %v619
  %621 = vmatmul.bf16.gmra.mxu0 %v323
  %v622 = vpop.f32.mrf.mxu0
  %v623 = vadd.f32 %v92, %v622
  %v624 = vpop.f32.mrf.mxu0
  %v625 = vadd.f32 %v92, %v624
  %626 = vmatmul.bf16.gmra.mxu0 %v326
  %v627 = vpop.f32.mrf.mxu0
  %v628 = vadd.f32 %v92, %v627
  %v629 = vpop.f32.mrf.mxu0
  %v630 = vadd.f32 %v92, %v629
  %631 = vmatmul.bf16.gmra.mxu0 %v329
  %v632 = vpop.f32.mrf.mxu0
  %v633 = vadd.f32 %v92, %v632
  %v634 = vpop.f32.mrf.mxu0
  %v635 = vadd.f32 %v92, %v634
  %636 = vmatmul.bf16.gmra.mxu0 %v332
  %v637 = vpop.f32.mrf.mxu0
  %v638 = vadd.f32 %v92, %v637
  %v639 = vpop.f32.mrf.mxu0
  %v640 = vadd.f32 %v92, %v639
  %641 = vmatmul.bf16.gmra.mxu0 %v335
  %v642 = vpop.f32.mrf.mxu0
  %v643 = vadd.f32 %v92, %v642
  %v644 = vpop.f32.mrf.mxu0
  %v645 = vadd.f32 %v92, %v644
  %646 = vmatmul.bf16.gmra.mxu0 %v338
  %v647 = vpop.f32.mrf.mxu0
  %v648 = vadd.f32 %v92, %v647
  %v649 = vpop.f32.mrf.mxu0
  %v650 = vadd.f32 %v92, %v649
  %651 = vmatmul.bf16.gmra.mxu0 %v341
  %v652 = vpop.f32.mrf.mxu0
  %v653 = vadd.f32 %v92, %v652
  %v654 = vpop.f32.mrf.mxu0
  %v655 = vadd.f32 %v92, %v654
  %656 = vmatmul.bf16.gmra.mxu0 %v344
  %v657 = vpop.f32.mrf.mxu0
  %v658 = vadd.f32 %v92, %v657
  %v659 = vpop.f32.mrf.mxu0
  %v660 = vadd.f32 %v92, %v659
  %661 = vmatmul.bf16.gmra.mxu0 %v347
  %v662 = vpop.f32.mrf.mxu0
  %v663 = vadd.f32 %v92, %v662
  %v664 = vpop.f32.mrf.mxu0
  %v665 = vadd.f32 %v92, %v664
  %666 = vmatmul.bf16.gmra.mxu0 %v350
  %v667 = vpop.f32.mrf.mxu0
  %v668 = vadd.f32 %v92, %v667
  %v669 = vpop.f32.mrf.mxu0
  %v670 = vadd.f32 %v92, %v669
  %671 = vmatmul.bf16.gmra.mxu0 %v353
  %v672 = vpop.f32.mrf.mxu0
  %v673 = vadd.f32 %v92, %v672
  %v674 = vpop.f32.mrf.mxu0
  %v675 = vadd.f32 %v92, %v674
  %676 = vmatmul.bf16.gmra.mxu0 %v356
  %v677 = vpop.f32.mrf.mxu0
  %v678 = vadd.f32 %v92, %v677
  %v679 = vpop.f32.mrf.mxu0
  %v680 = vadd.f32 %v92, %v679
  %681 = vmatmul.bf16.gmra.mxu0 %v359
  %v682 = vpop.f32.mrf.mxu0
  %v683 = vadd.f32 %v92, %v682
  %v684 = vpop.f32.mrf.mxu0
  %v685 = vadd.f32 %v92, %v684
  %686 = vmatmul.bf16.gmra.mxu0 %v362
  %v687 = vpop.f32.mrf.mxu0
  %v688 = vadd.f32 %v92, %v687
  %v689 = vpop.f32.mrf.mxu0
  %v690 = vadd.f32 %v92, %v689
  %691 = vmatmul.bf16.gmra.mxu0 %v365
  %v692 = vpop.f32.mrf.mxu0
  %v693 = vadd.f32 %v92, %v692
  %v694 = vpop.f32.mrf.mxu0
  %v695 = vadd.f32 %v92, %v694
  %696 = vmatmul.bf16.gmra.mxu0 %v368
  %v697 = vpop.f32.mrf.mxu0
  %v698 = vadd.f32 %v92, %v697
  %v699 = vpop.f32.mrf.mxu0
  %v700 = vadd.f32 %v92, %v699
  %701 = vmatmul.bf16.gmra.mxu0 %v371
  %v702 = vpop.f32.mrf.mxu0
  %v703 = vadd.f32 %v92, %v702
  %v704 = vpop.f32.mrf.mxu0
  %v705 = vadd.f32 %v92, %v704
  %706 = vmatmul.bf16.gmra.mxu0 %v374
  %v707 = vpop.f32.mrf.mxu0
  %v708 = vadd.f32 %v92, %v707
  %v709 = vpop.f32.mrf.mxu0
  %v710 = vadd.f32 %v92, %v709
  %711 = vmatmul.bf16.gmra.mxu0 %v377
  %v712 = vpop.f32.mrf.mxu0
  %v713 = vadd.f32 %v92, %v712
  %v714 = vpop.f32.mrf.mxu0
  %v715 = vadd.f32 %v92, %v714
  %716 = vmatmul.bf16.gmra.mxu0 %v380
  %v717 = vpop.f32.mrf.mxu0
  %v718 = vadd.f32 %v92, %v717
  %v719 = vpop.f32.mrf.mxu0
  %v720 = vadd.f32 %v92, %v719
  %721 = vmatmul.bf16.gmra.mxu0 %v383
  %v722 = vpop.f32.mrf.mxu0
  %v723 = vadd.f32 %v92, %v722
  %v724 = vpop.f32.mrf.mxu0
  %v725 = vadd.f32 %v92, %v724
  %726 = vmatmul.bf16.gmra.mxu0 %v386
  %v727 = vpop.f32.mrf.mxu0
  %v728 = vadd.f32 %v92, %v727
  %v729 = vpop.f32.mrf.mxu0
  %v730 = vadd.f32 %v92, %v729
  %731 = vmatmul.bf16.gmra.mxu0 %v389
  %v732 = vpop.f32.mrf.mxu0
  %v733 = vadd.f32 %v92, %v732
  %v734 = vpop.f32.mrf.mxu0
  %v735 = vadd.f32 %v92, %v734
  %736 = vmatmul.bf16.gmra.mxu0 %v392
  %v737 = vpop.f32.mrf.mxu0
  %v738 = vadd.f32 %v92, %v737
  %v739 = vpop.f32.mrf.mxu0
  %v740 = vadd.f32 %v92, %v739
  %741 = vdwg.mxu0
  %742 = vmatpush.bf16.msra.mxu0 0
  %743 = vmatpush.bf16.msra.mxu0 0
  %744 = vmatpush.bf16.msra.mxu0 0
  %745 = vmatpush.bf16.msra.mxu0 0
  %746 = vmatpush.bf16.msra.mxu0 0
  %747 = vmatpush.bf16.msra.mxu0 %v402
  %748 = vmatpush.bf16.msra.mxu0 %v287
  %749 = vmatpush.bf16.msra.mxu0 %v284
  %750 = vmatmul.bf16.gmra.mxu0 %v299
  %v751 = vpop.f32.mrf.mxu0
  %v752 = vadd.f32 %v93, %v751
  %v753 = vpop.f32.mrf.mxu0
  %v754 = vadd.f32 %v93, %v753
  %755 = vmatmul.bf16.gmra.mxu0 %v302
  %v756 = vpop.f32.mrf.mxu0
  %v757 = vadd.f32 %v93, %v756
  %v758 = vpop.f32.mrf.mxu0
  %v759 = vadd.f32 %v93, %v758
  %760 = vmatmul.bf16.gmra.mxu0 %v305
  %v761 = vpop.f32.mrf.mxu0
  %v762 = vadd.f32 %v93, %v761
  %v763 = vpop.f32.mrf.mxu0
  %v764 = vadd.f32 %v93, %v763
  %765 = vmatmul.bf16.gmra.mxu0 %v308
  %v766 = vpop.f32.mrf.mxu0
  %v767 = vadd.f32 %v93, %v766
  %v768 = vpop.f32.mrf.mxu0
  %v769 = vadd.f32 %v93, %v768
  %770 = vmatmul.bf16.gmra.mxu0 %v311
  %v771 = vpop.f32.mrf.mxu0
  %v772 = vadd.f32 %v93, %v771
  %v773 = vpop.f32.mrf.mxu0
  %v774 = vadd.f32 %v93, %v773
  %775 = vmatmul.bf16.gmra.mxu0 %v314
  %v776 = vpop.f32.mrf.mxu0
  %v777 = vadd.f32 %v93, %v776
  %v778 = vpop.f32.mrf.mxu0
  %v779 = vadd.f32 %v93, %v778
  %780 = vmatmul.bf16.gmra.mxu0 %v317
  %v781 = vpop.f32.mrf.mxu0
  %v782 = vadd.f32 %v93, %v781
  %v783 = vpop.f32.mrf.mxu0
  %v784 = vadd.f32 %v93, %v783
  %785 = vmatmul.bf16.gmra.mxu0 %v320
  %v786 = vpop.f32.mrf.mxu0
  %v787 = vadd.f32 %v93, %v786
  %v788 = vpop.f32.mrf.mxu0
  %v789 = vadd.f32 %v93, %v788
  %790 = vmatmul.bf16.gmra.mxu0 %v323
  %v791 = vpop.f32.mrf.mxu0
  %v792 = vadd.f32 %v93, %v791
  %v793 = vpop.f32.mrf.mxu0
  %v794 = vadd.f32 %v93, %v793
  %795 = vmatmul.bf16.gmra.mxu0 %v326
  %v796 = vpop.f32.mrf.mxu0
  %v797 = vadd.f32 %v93, %v796
  %v798 = vpop.f32.mrf.mxu0
  %v799 = vadd.f32 %v93, %v798
  %800 = vmatmul.bf16.gmra.mxu0 %v329
  %v801 = vpop.f32.mrf.mxu0
  %v802 = vadd.f32 %v93, %v801
  %v803 = vpop.f32.mrf.mxu0
  %v804 = vadd.f32 %v93, %v803
  %805 = vmatmul.bf16.gmra.mxu0 %v332
  %v806 = vpop.f32.mrf.mxu0
  %v807 = vadd.f32 %v93, %v806
  %v808 = vpop.f32.mrf.mxu0
  %v809 = vadd.f32 %v93, %v808
  %810 = vmatmul.bf16.gmra.mxu0 %v335
  %v811 = vpop.f32.mrf.mxu0
  %v812 = vadd.f32 %v93, %v811
  %v813 = vpop.f32.mrf.mxu0
  %v814 = vadd.f32 %v93, %v813
  %815 = vmatmul.bf16.gmra.mxu0 %v338
  %v816 = vpop.f32.mrf.mxu0
  %v817 = vadd.f32 %v93, %v816
  %v818 = vpop.f32.mrf.mxu0
  %v819 = vadd.f32 %v93, %v818
  %820 = vmatmul.bf16.gmra.mxu0 %v341
  %v821 = vpop.f32.mrf.mxu0
  %v822 = vadd.f32 %v93, %v821
  %v823 = vpop.f32.mrf.mxu0
  %v824 = vadd.f32 %v93, %v823
  %825 = vmatmul.bf16.gmra.mxu0 %v344
  %v826 = vpop.f32.mrf.mxu0
  %v827 = vadd.f32 %v93, %v826
  %v828 = vpop.f32.mrf.mxu0
  %v829 = vadd.f32 %v93, %v828
  %830 = vmatmul.bf16.gmra.mxu0 %v347
  %v831 = vpop.f32.mrf.mxu0
  %v832 = vadd.f32 %v93, %v831
  %v833 = vpop.f32.mrf.mxu0
  %v834 = vadd.f32 %v93, %v833
  %835 = vmatmul.bf16.gmra.mxu0 %v350
  %v836 = vpop.f32.mrf.mxu0
  %v837 = vadd.f32 %v93, %v836
  %v838 = vpop.f32.mrf.mxu0
  %v839 = vadd.f32 %v93, %v838
  %840 = vmatmul.bf16.gmra.mxu0 %v353
  %v841 = vpop.f32.mrf.mxu0
  %v842 = vadd.f32 %v93, %v841
  %v843 = vpop.f32.mrf.mxu0
  %v844 = vadd.f32 %v93, %v843
  %845 = vmatmul.bf16.gmra.mxu0 %v356
  %v846 = vpop.f32.mrf.mxu0
  %v847 = vadd.f32 %v93, %v846
  %v848 = vpop.f32.mrf.mxu0
  %v849 = vadd.f32 %v93, %v848
  %850 = vmatmul.bf16.gmra.mxu0 %v359
  %v851 = vpop.f32.mrf.mxu0
  %v852 = vadd.f32 %v93, %v851
  %v853 = vpop.f32.mrf.mxu0
  %v854 = vadd.f32 %v93, %v853
  %855 = vmatmul.bf16.gmra.mxu0 %v362
  %v856 = vpop.f32.mrf.mxu0
  %v857 = vadd.f32 %v93, %v856
  %v858 = vpop.f32.mrf.mxu0
  %v859 = vadd.f32 %v93, %v858
  %860 = vmatmul.bf16.gmra.mxu0 %v365
  %v861 = vpop.f32.mrf.mxu0
  %v862 = vadd.f32 %v93, %v861
  %v863 = vpop.f32.mrf.mxu0
  %v864 = vadd.f32 %v93, %v863
  %865 = vmatmul.bf16.gmra.mxu0 %v368
  %v866 = vpop.f32.mrf.mxu0
  %v867 = vadd.f32 %v93, %v866
  %v868 = vpop.f32.mrf.mxu0
  %v869 = vadd.f32 %v93, %v868
  %870 = vmatmul.bf16.gmra.mxu0 %v371
  %v871 = vpop.f32.mrf.mxu0
  %v872 = vadd.f32 %v93, %v871
  %v873 = vpop.f32.mrf.mxu0
  %v874 = vadd.f32 %v93, %v873
  %875 = vmatmul.bf16.gmra.mxu0 %v374
  %v876 = vpop.f32.mrf.mxu0
  %v877 = vadd.f32 %v93, %v876
  %v878 = vpop.f32.mrf.mxu0
  %v879 = vadd.f32 %v93, %v878
  %880 = vmatmul.bf16.gmra.mxu0 %v377
  %v881 = vpop.f32.mrf.mxu0
  %v882 = vadd.f32 %v93, %v881
  %v883 = vpop.f32.mrf.mxu0
  %v884 = vadd.f32 %v93, %v883
  %885 = vmatmul.bf16.gmra.mxu0 %v380
  %v886 = vpop.f32.mrf.mxu0
  %v887 = vadd.f32 %v93, %v886
  %v888 = vpop.f32.mrf.mxu0
  %v889 = vadd.f32 %v93, %v888
  %890 = vmatmul.bf16.gmra.mxu0 %v383
  %v891 = vpop.f32.mrf.mxu0
  %v892 = vadd.f32 %v93, %v891
  %v893 = vpop.f32.mrf.mxu0
  %v894 = vadd.f32 %v93, %v893
  %895 = vmatmul.bf16.gmra.mxu0 %v386
  %v896 = vpop.f32.mrf.mxu0
  %v897 = vadd.f32 %v93, %v896
  %v898 = vpop.f32.mrf.mxu0
  %v899 = vadd.f32 %v93, %v898
  %900 = vmatmul.bf16.gmra.mxu0 %v389
  %v901 = vpop.f32.mrf.mxu0
  %v902 = vadd.f32 %v93, %v901
  %v903 = vpop.f32.mrf.mxu0
  %v904 = vadd.f32 %v93, %v903
  %905 = vmatmul.bf16.gmra.mxu0 %v392
  %v906 = vpop.f32.mrf.mxu0
  %v907 = vadd.f32 %v93, %v906
  %v908 = vpop.f32.mrf.mxu0
  %v909 = vadd.f32 %v93, %v908
  %910 = vdwg.mxu0
  %v911 = vmax.f32 %v414, 0.0
  %v912 = vmax.f32 %v583, 0.0
  %v913 = vmax.f32 %v752, 0.0
  %v914 = vmax.f32 %v416, 0.0
  %v915 = vmax.f32 %v585, 0.0
  %v916 = vmax.f32 %v754, 0.0
  %v917 = vmax.f32 %v419, 0.0
  %v918 = vmax.f32 %v588, 0.0
  %v919 = vmax.f32 %v757, 0.0
  %v920 = vmax.f32 %v421, 0.0
  %v921 = vmax.f32 %v590, 0.0
  %v922 = vmax.f32 %v759, 0.0
  %v923 = vmax.f32 %v424, 0.0
  %v924 = vmax.f32 %v593, 0.0
  %v925 = vmax.f32 %v762, 0.0
  %v926 = vmax.f32 %v426, 0.0
  %v927 = vmax.f32 %v595, 0.0
  %v928 = vmax.f32 %v764, 0.0
  %v929 = vmax.f32 %v429, 0.0
  %v930 = vmax.f32 %v598, 0.0
  %v931 = vmax.f32 %v767, 0.0
  %v932 = vmax.f32 %v431, 0.0
  %v933 = vmax.f32 %v600, 0.0
  %v934 = vmax.f32 %v769, 0.0
  %v935 = vmax.f32 %v434, 0.0
  %v936 = vmax.f32 %v603, 0.0
  %v937 = vmax.f32 %v772, 0.0
  %v938 = vmax.f32 %v436, 0.0
  %v939 = vmax.f32 %v605, 0.0
  %v940 = vmax.f32 %v774, 0.0
  %v941 = vmax.f32 %v439, 0.0
  %v942 = vmax.f32 %v608, 0.0
  %v943 = vmax.f32 %v777, 0.0
  %v944 = vmax.f32 %v441, 0.0
  %v945 = vmax.f32 %v610, 0.0
  %v946 = vmax.f32 %v779, 0.0
  %v947 = vmax.f32 %v444, 0.0
  %v948 = vmax.f32 %v613, 0.0
  %v949 = vmax.f32 %v782, 0.0
  %v950 = vmax.f32 %v446, 0.0
  %v951 = vmax.f32 %v615, 0.0
  %v952 = vmax.f32 %v784, 0.0
  %v953 = vmax.f32 %v449, 0.0
  %v954 = vmax.f32 %v618, 0.0
  %v955 = vmax.f32 %v787, 0.0
  %v956 = vmax.f32 %v451, 0.0
  %v957 = vmax.f32 %v620, 0.0
  %v958 = vmax.f32 %v789, 0.0
  %v959 = vmax.f32 %v454, 0.0
  %v960 = vmax.f32 %v623, 0.0
  %v961 = vmax.f32 %v792, 0.0
  %v962 = vmax.f32 %v456, 0.0
  %v963 = vmax.f32 %v625, 0.0
  %v964 = vmax.f32 %v794, 0.0
  %v965 = vmax.f32 %v459, 0.0
  %v966 = vmax.f32 %v628, 0.0
  %v967 = vmax.f32 %v797, 0.0
  %v968 = vmax.f32 %v461, 0.0
  %v969 = vmax.f32 %v630, 0.0
  %v970 = vmax.f32 %v799, 0.0
  %v971 = vmax.f32 %v464, 0.0
  %v972 = vmax.f32 %v633, 0.0
  %v973 = vmax.f32 %v802, 0.0
  %v974 = vmax.f32 %v466, 0.0
  %v975 = vmax.f32 %v635, 0.0
  %v976 = vmax.f32 %v804, 0.0
  %v977 = vmax.f32 %v469, 0.0
  %v978 = vmax.f32 %v638, 0.0
  %v979 = vmax.f32 %v807, 0.0
  %v980 = vmax.f32 %v471, 0.0
  %v981 = vmax.f32 %v640, 0.0
  %v982 = vmax.f32 %v809, 0.0
  %v983 = vmax.f32 %v474, 0.0
  %v984 = vmax.f32 %v643, 0.0
  %v985 = vmax.f32 %v812, 0.0
  %v986 = vmax.f32 %v476, 0.0
  %v987 = vmax.f32 %v645, 0.0
  %v988 = vmax.f32 %v814, 0.0
  %v989 = vmax.f32 %v479, 0.0
  %v990 = vmax.f32 %v648, 0.0
  %v991 = vmax.f32 %v817, 0.0
  %v992 = vmax.f32 %v481, 0.0
  %v993 = vmax.f32 %v650, 0.0
  %v994 = vmax.f32 %v819, 0.0
  %v995 = vmax.f32 %v484, 0.0
  %v996 = vmax.f32 %v653, 0.0
  %v997 = vmax.f32 %v822, 0.0
  %v998 = vmax.f32 %v486, 0.0
  %v999 = vmax.f32 %v655, 0.0
  %v1000 = vmax.f32 %v824, 0.0
  %v1001 = vmax.f32 %v489, 0.0
  %v1002 = vmax.f32 %v658, 0.0
  %v1003 = vmax.f32 %v827, 0.0
  %v1004 = vmax.f32 %v491, 0.0
  %v1005 = vmax.f32 %v660, 0.0
  %v1006 = vmax.f32 %v829, 0.0
  %v1007 = vmax.f32 %v494, 0.0
  %v1008 = vmax.f32 %v663, 0.0
  %v1009 = vmax.f32 %v832, 0.0
  %v1010 = vmax.f32 %v496, 0.0
  %v1011 = vmax.f32 %v665, 0.0
  %v1012 = vmax.f32 %v834, 0.0
  %v1013 = vmax.f32 %v499, 0.0
  %v1014 = vmax.f32 %v668, 0.0
  %v1015 = vmax.f32 %v837, 0.0
  %v1016 = vmax.f32 %v501, 0.0
  %v1017 = vmax.f32 %v670, 0.0
  %v1018 = vmax.f32 %v839, 0.0
  %v1019 = vmax.f32 %v504, 0.0
  %v1020 = vmax.f32 %v673, 0.0
  %v1021 = vmax.f32 %v842, 0.0
  %v1022 = vmax.f32 %v506, 0.0
  %v1023 = vmax.f32 %v675, 0.0
  %v1024 = vmax.f32 %v844, 0.0
  %v1025 = vmax.f32 %v509, 0.0
  %v1026 = vmax.f32 %v678, 0.0
  %v1027 = vmax.f32 %v847, 0.0
  %v1028 = vmax.f32 %v511, 0.0
  %v1029 = vmax.f32 %v680, 0.0
  %v1030 = vmax.f32 %v849, 0.0
  %v1031 = vmax.f32 %v514, 0.0
  %v1032 = vmax.f32 %v683, 0.0
  %v1033 = vmax.f32 %v852, 0.0
  %v1034 = vmax.f32 %v516, 0.0
  %v1035 = vmax.f32 %v685, 0.0
  %v1036 = vmax.f32 %v854, 0.0
  %v1037 = vmax.f32 %v519, 0.0
  %v1038 = vmax.f32 %v688, 0.0
  %v1039 = vmax.f32 %v857, 0.0
  %v1040 = vmax.f32 %v521, 0.0
  %v1041 = vmax.f32 %v690, 0.0
  %v1042 = vmax.f32 %v859, 0.0
  %v1043 = vmax.f32 %v524, 0.0
  %v1044 = vmax.f32 %v693, 0.0
  %v1045 = vmax.f32 %v862, 0.0
  %v1046 = vmax.f32 %v526, 0.0
  %v1047 = vmax.f32 %v695, 0.0
  %v1048 = vmax.f32 %v864, 0.0
  %v1049 = vmax.f32 %v529, 0.0
  %v1050 = vmax.f32 %v698, 0.0
  %v1051 = vmax.f32 %v867, 0.0
  %v1052 = vmax.f32 %v531, 0.0
  %v1053 = vmax.f32 %v700, 0.0
  %v1054 = vmax.f32 %v869, 0.0
  %v1055 = vmax.f32 %v534, 0.0
  %v1056 = vmax.f32 %v703, 0.0
  %v1057 = vmax.f32 %v872, 0.0
  %v1058 = vmax.f32 %v536, 0.0
  %v1059 = vmax.f32 %v705, 0.0
  %v1060 = vmax.f32 %v874, 0.0
  %v1061 = vmax.f32 %v539, 0.0
  %v1062 = vmax.f32 %v708, 0.0
  %v1063 = vmax.f32 %v877, 0.0
  %v1064 = vmax.f32 %v541, 0.0
  %v1065 = vmax.f32 %v710, 0.0
  %v1066 = vmax.f32 %v879, 0.0
  %v1067 = vmax.f32 %v544, 0.0
  %v1068 = vmax.f32 %v713, 0.0
  %v1069 = vmax.f32 %v882, 0.0
  %v1070 = vmax.f32 %v546, 0.0
  %v1071 = vmax.f32 %v715, 0.0
  %v1072 = vmax.f32 %v884, 0.0
  %v1073 = vmax.f32 %v549, 0.0
  %v1074 = vmax.f32 %v718, 0.0
  %v1075 = vmax.f32 %v887, 0.0
  %v1076 = vmax.f32 %v551, 0.0
  %v1077 = vmax.f32 %v720, 0.0
  %v1078 = vmax.f32 %v889, 0.0
  %v1079 = vmax.f32 %v554, 0.0
  %v1080 = vmax.f32 %v723, 0.0
  %v1081 = vmax.f32 %v892, 0.0
  %v1082 = vmax.f32 %v556, 0.0
  %v1083 = vmax.f32 %v725, 0.0
  %v1084 = vmax.f32 %v894, 0.0
  %v1085 = vmax.f32 %v559, 0.0
  %v1086 = vmax.f32 %v728, 0.0
  %v1087 = vmax.f32 %v897, 0.0
  %v1088 = vmax.f32 %v561, 0.0
  %v1089 = vmax.f32 %v730, 0.0
  %v1090 = vmax.f32 %v899, 0.0
  %v1091 = vmax.f32 %v564, 0.0
  %v1092 = vmax.f32 %v733, 0.0
  %v1093 = vmax.f32 %v902, 0.0
  %v1094 = vmax.f32 %v566, 0.0
  %v1095 = vmax.f32 %v735, 0.0
  %v1096 = vmax.f32 %v904, 0.0
  %v1097 = vmax.f32 %v569, 0.0
  %v1098 = vmax.f32 %v738, 0.0
  %v1099 = vmax.f32 %v907, 0.0
  %v1100 = vmax.f32 %v571, 0.0
  %v1101 = vmax.f32 %v740, 0.0
  %v1102 = vmax.f32 %v909, 0.0
  %v1103 = vpack.c.bf16 %v912, %v911
  %v1104 = vpack.c.bf16 %v913, %v913
  %v1105 = vpack.c.bf16 %v915, %v914
  %v1106 = vpack.c.bf16 %v916, %v916
  %v1107 = vpack.c.bf16 %v918, %v917
  %v1108 = vpack.c.bf16 %v919, %v919
  %v1109 = vpack.c.bf16 %v921, %v920
  %v1110 = vpack.c.bf16 %v922, %v922
  %v1111 = vpack.c.bf16 %v924, %v923
  %v1112 = vpack.c.bf16 %v925, %v925
  %v1113 = vpack.c.bf16 %v927, %v926
  %v1114 = vpack.c.bf16 %v928, %v928
  %v1115 = vpack.c.bf16 %v930, %v929
  %v1116 = vpack.c.bf16 %v931, %v931
  %v1117 = vpack.c.bf16 %v933, %v932
  %v1118 = vpack.c.bf16 %v934, %v934
  %v1119 = vpack.c.bf16 %v936, %v935
  %v1120 = vpack.c.bf16 %v937, %v937
  %v1121 = vpack.c.bf16 %v939, %v938
  %v1122 = vpack.c.bf16 %v940, %v940
  %v1123 = vpack.c.bf16 %v942, %v941
  %v1124 = vpack.c.bf16 %v943, %v943
  %v1125 = vpack.c.bf16 %v945, %v944
  %v1126 = vpack.c.bf16 %v946, %v946
  %v1127 = vpack.c.bf16 %v948, %v947
  %v1128 = vpack.c.bf16 %v949, %v949
  %v1129 = vpack.c.bf16 %v951, %v950
  %v1130 = vpack.c.bf16 %v952, %v952
  %v1131 = vpack.c.bf16 %v954, %v953
  %v1132 = vpack.c.bf16 %v955, %v955
  %v1133 = vpack.c.bf16 %v957, %v956
  %v1134 = vpack.c.bf16 %v958, %v958
  %v1135 = vpack.c.bf16 %v960, %v959
  %v1136 = vpack.c.bf16 %v961, %v961
  %v1137 = vpack.c.bf16 %v963, %v962
  %v1138 = vpack.c.bf16 %v964, %v964
  %v1139 = vpack.c.bf16 %v966, %v965
  %v1140 = vpack.c.bf16 %v967, %v967
  %v1141 = vpack.c.bf16 %v969, %v968
  %v1142 = vpack.c.bf16 %v970, %v970
  %v1143 = vpack.c.bf16 %v972, %v971
  %v1144 = vpack.c.bf16 %v973, %v973
  %v1145 = vpack.c.bf16 %v975, %v974
  %v1146 = vpack.c.bf16 %v976, %v976
  %v1147 = vpack.c.bf16 %v978, %v977
  %v1148 = vpack.c.bf16 %v979, %v979
  %v1149 = vpack.c.bf16 %v981, %v980
  %v1150 = vpack.c.bf16 %v982, %v982
  %v1151 = vpack.c.bf16 %v984, %v983
  %v1152 = vpack.c.bf16 %v985, %v985
  %v1153 = vpack.c.bf16 %v987, %v986
  %v1154 = vpack.c.bf16 %v988, %v988
  %v1155 = vpack.c.bf16 %v990, %v989
  %v1156 = vpack.c.bf16 %v991, %v991
  %v1157 = vpack.c.bf16 %v993, %v992
  %v1158 = vpack.c.bf16 %v994, %v994
  %v1159 = vpack.c.bf16 %v996, %v995
  %v1160 = vpack.c.bf16 %v997, %v997
  %v1161 = vpack.c.bf16 %v999, %v998
  %v1162 = vpack.c.bf16 %v1000, %v1000
  %v1163 = vpack.c.bf16 %v1002, %v1001
  %v1164 = vpack.c.bf16 %v1003, %v1003
  %v1165 = vpack.c.bf16 %v1005, %v1004
  %v1166 = vpack.c.bf16 %v1006, %v1006
  %v1167 = vpack.c.bf16 %v1008, %v1007
  %v1168 = vpack.c.bf16 %v1009, %v1009
  %v1169 = vpack.c.bf16 %v1011, %v1010
  %v1170 = vpack.c.bf16 %v1012, %v1012
  %v1171 = vpack.c.bf16 %v1014, %v1013
  %v1172 = vpack.c.bf16 %v1015, %v1015
  %v1173 = vpack.c.bf16 %v1017, %v1016
  %v1174 = vpack.c.bf16 %v1018, %v1018
  %v1175 = vpack.c.bf16 %v1020, %v1019
  %v1176 = vpack.c.bf16 %v1021, %v1021
  %v1177 = vpack.c.bf16 %v1023, %v1022
  %v1178 = vpack.c.bf16 %v1024, %v1024
  %v1179 = vpack.c.bf16 %v1026, %v1025
  %v1180 = vpack.c.bf16 %v1027, %v1027
  %v1181 = vpack.c.bf16 %v1029, %v1028
  %v1182 = vpack.c.bf16 %v1030, %v1030
  %v1183 = vpack.c.bf16 %v1032, %v1031
  %v1184 = vpack.c.bf16 %v1033, %v1033
  %v1185 = vpack.c.bf16 %v1035, %v1034
  %v1186 = vpack.c.bf16 %v1036, %v1036
  %v1187 = vpack.c.bf16 %v1038, %v1037
  %v1188 = vpack.c.bf16 %v1039, %v1039
  %v1189 = vpack.c.bf16 %v1041, %v1040
  %v1190 = vpack.c.bf16 %v1042, %v1042
  %v1191 = vpack.c.bf16 %v1044, %v1043
  %v1192 = vpack.c.bf16 %v1045, %v1045
  %v1193 = vpack.c.bf16 %v1047, %v1046
  %v1194 = vpack.c.bf16 %v1048, %v1048
  %v1195 = vpack.c.bf16 %v1050, %v1049
  %v1196 = vpack.c.bf16 %v1051, %v1051
  %v1197 = vpack.c.bf16 %v1053, %v1052
  %v1198 = vpack.c.bf16 %v1054, %v1054
  %v1199 = vpack.c.bf16 %v1056, %v1055
  %v1200 = vpack.c.bf16 %v1057, %v1057
  %v1201 = vpack.c.bf16 %v1059, %v1058
  %v1202 = vpack.c.bf16 %v1060, %v1060
  %v1203 = vpack.c.bf16 %v1062, %v1061
  %v1204 = vpack.c.bf16 %v1063, %v1063
  %v1205 = vpack.c.bf16 %v1065, %v1064
  %v1206 = vpack.c.bf16 %v1066, %v1066
  %v1207 = vpack.c.bf16 %v1068, %v1067
  %v1208 = vpack.c.bf16 %v1069, %v1069
  %v1209 = vpack.c.bf16 %v1071, %v1070
  %v1210 = vpack.c.bf16 %v1072, %v1072
  %v1211 = vpack.c.bf16 %v1074, %v1073
  %v1212 = vpack.c.bf16 %v1075, %v1075
  %v1213 = vpack.c.bf16 %v1077, %v1076
  %v1214 = vpack.c.bf16 %v1078, %v1078
  %v1215 = vpack.c.bf16 %v1080, %v1079
  %v1216 = vpack.c.bf16 %v1081, %v1081
  %v1217 = vpack.c.bf16 %v1083, %v1082
  %v1218 = vpack.c.bf16 %v1084, %v1084
  %v1219 = vpack.c.bf16 %v1086, %v1085
  %v1220 = vpack.c.bf16 %v1087, %v1087
  %v1221 = vpack.c.bf16 %v1089, %v1088
  %v1222 = vpack.c.bf16 %v1090, %v1090
  %v1223 = vpack.c.bf16 %v1092, %v1091
  %v1224 = vpack.c.bf16 %v1093, %v1093
  %v1225 = vpack.c.bf16 %v1095, %v1094
  %v1226 = vpack.c.bf16 %v1096, %v1096
  %v1227 = vpack.c.bf16 %v1098, %v1097
  %v1228 = vpack.c.bf16 %v1099, %v1099
  %v1229 = vpack.c.bf16 %v1101, %v1100
  %v1230 = vpack.c.bf16 %v1102, %v1102
  %1231 = vst [vmem:[%s3] sm:$0xff] %v1103
  %1232 = vst [vmem:[%s3 + $0x8] sm:$0xf] %v1104
  %1233 = vst [vmem:[%s3 + $0xc] sm:$0xff] %v1105
  %1234 = vst [vmem:[%s3 + $0x14] sm:$0xf] %v1106
  %1235 = vst [vmem:[%s3 + $0x18] sm:$0xff] %v1107
  %1236 = vst [vmem:[%s3 + $0x20] sm:$0xf] %v1108
  %1237 = vst [vmem:[%s3 + $0x24] sm:$0xff] %v1109
  %1238 = vst [vmem:[%s3 + $0x2c] sm:$0xf] %v1110
  %1239 = vst [vmem:[%s3 + $0x30] sm:$0xff] %v1111
  %1240 = vst [vmem:[%s3 + $0x38] sm:$0xf] %v1112
  %1241 = vst [vmem:[%s3 + $0x3c] sm:$0xff] %v1113
  %1242 = vst [vmem:[%s3 + $0x44] sm:$0xf] %v1114
  %1243 = vst [vmem:[%s3 + $0x48] sm:$0xff] %v1115
  %1244 = vst [vmem:[%s3 + $0x50] sm:$0xf] %v1116
  %1245 = vst [vmem:[%s3 + $0x54] sm:$0xff] %v1117
  %1246 = vst [vmem:[%s3 + $0x5c] sm:$0xf] %v1118
  %1247 = vst [vmem:[%s3 + $0x60] sm:$0xff] %v1119
  %1248 = vst [vmem:[%s3 + $0x68] sm:$0xf] %v1120
  %1249 = vst [vmem:[%s3 + $0x6c] sm:$0xff] %v1121
  %1250 = vst [vmem:[%s3 + $0x74] sm:$0xf] %v1122
  %1251 = vst [vmem:[%s3 + $0x78] sm:$0xff] %v1123
  %1252 = vst [vmem:[%s3 + $0x80] sm:$0xf] %v1124
  %1253 = vst [vmem:[%s3 + $0x84] sm:$0xff] %v1125
  %1254 = vst [vmem:[%s3 + $0x8c] sm:$0xf] %v1126
  %1255 = vst [vmem:[%s3 + $0x90] sm:$0xff] %v1127
  %1256 = vst [vmem:[%s3 + $0x98] sm:$0xf] %v1128
  %1257 = vst [vmem:[%s3 + $0x9c] sm:$0xff] %v1129
  %1258 = vst [vmem:[%s3 + $0xa4] sm:$0xf] %v1130
  %1259 = vst [vmem:[%s3 + $0xa8] sm:$0xff] %v1131
  %1260 = vst [vmem:[%s3 + $0xb0] sm:$0xf] %v1132
  %1261 = vst [vmem:[%s3 + $0xb4] sm:$0xff] %v1133
  %1262 = vst [vmem:[%s3 + $0xbc] sm:$0xf] %v1134
  %1263 = vst [vmem:[%s3 + $0xc0] sm:$0xff] %v1135
  %1264 = vst [vmem:[%s3 + $0xc8] sm:$0xf] %v1136
  %1265 = vst [vmem:[%s3 + $0xcc] sm:$0xff] %v1137
  %1266 = vst [vmem:[%s3 + $0xd4] sm:$0xf] %v1138
  %1267 = vst [vmem:[%s3 + $0xd8] sm:$0xff] %v1139
  %1268 = vst [vmem:[%s3 + $0xe0] sm:$0xf] %v1140
  %1269 = vst [vmem:[%s3 + $0xe4] sm:$0xff] %v1141
  %1270 = vst [vmem:[%s3 + $0xec] sm:$0xf] %v1142
  %1271 = vst [vmem:[%s3 + $0xf0] sm:$0xff] %v1143
  %1272 = vst [vmem:[%s3 + $0xf8] sm:$0xf] %v1144
  %1273 = vst [vmem:[%s3 + $0xfc] sm:$0xff] %v1145
  %1274 = vst [vmem:[%s3 + $0x104] sm:$0xf] %v1146
  %1275 = vst [vmem:[%s3 + $0x108] sm:$0xff] %v1147
  %1276 = vst [vmem:[%s3 + $0x110] sm:$0xf] %v1148
  %1277 = vst [vmem:[%s3 + $0x114] sm:$0xff] %v1149
  %1278 = vst [vmem:[%s3 + $0x11c] sm:$0xf] %v1150
  %1279 = vst [vmem:[%s3 + $0x120] sm:$0xff] %v1151
  %1280 = vst [vmem:[%s3 + $0x128] sm:$0xf] %v1152
  %1281 = vst [vmem:[%s3 + $0x12c] sm:$0xff] %v1153
  %1282 = vst [vmem:[%s3 + $0x134] sm:$0xf] %v1154
  %1283 = vst [vmem:[%s3 + $0x138] sm:$0xff] %v1155
  %1284 = vst [vmem:[%s3 + $0x140] sm:$0xf] %v1156
  %1285 = vst [vmem:[%s3 + $0x144] sm:$0xff] %v1157
  %1286 = vst [vmem:[%s3 + $0x14c] sm:$0xf] %v1158
  %1287 = vst [vmem:[%s3 + $0x150] sm:$0xff] %v1159
  %1288 = vst [vmem:[%s3 + $0x158] sm:$0xf] %v1160
  %1289 = vst [vmem:[%s3 + $0x15c] sm:$0xff] %v1161
  %1290 = vst [vmem:[%s3 + $0x164] sm:$0xf] %v1162
  %1291 = vst [vmem:[%s3 + $0x168] sm:$0xff] %v1163
  %1292 = vst [vmem:[%s3 + $0x170] sm:$0xf] %v1164
  %1293 = vst [vmem:[%s3 + $0x174] sm:$0xff] %v1165
  %1294 = vst [vmem:[%s3 + $0x17c] sm:$0xf] %v1166
  %1295 = vst [vmem:[%s3 + $0x180] sm:$0xff] %v1167
  %1296 = vst [vmem:[%s3 + $0x188] sm:$0xf] %v1168
  %1297 = vst [vmem:[%s3 + $0x18c] sm:$0xff] %v1169
  %1298 = vst [vmem:[%s3 + $0x194] sm:$0xf] %v1170
  %1299 = vst [vmem:[%s3 + $0x198] sm:$0xff] %v1171
  %1300 = vst [vmem:[%s3 + $0x1a0] sm:$0xf] %v1172
  %1301 = vst [vmem:[%s3 + $0x1a4] sm:$0xff] %v1173
  %1302 = vst [vmem:[%s3 + $0x1ac] sm:$0xf] %v1174
  %1303 = vst [vmem:[%s3 + $0x1b0] sm:$0xff] %v1175
  %1304 = vst [vmem:[%s3 + $0x1b8] sm:$0xf] %v1176
  %1305 = vst [vmem:[%s3 + $0x1bc] sm:$0xff] %v1177
  %1306 = vst [vmem:[%s3 + $0x1c4] sm:$0xf] %v1178
  %1307 = vst [vmem:[%s3 + $0x1c8] sm:$0xff] %v1179
  %1308 = vst [vmem:[%s3 + $0x1d0] sm:$0xf] %v1180
  %1309 = vst [vmem:[%s3 + $0x1d4] sm:$0xff] %v1181
  %1310 = vst [vmem:[%s3 + $0x1dc] sm:$0xf] %v1182
  %1311 = vst [vmem:[%s3 + $0x1e0] sm:$0xff] %v1183
  %1312 = vst [vmem:[%s3 + $0x1e8] sm:$0xf] %v1184
  %1313 = vst [vmem:[%s3 + $0x1ec] sm:$0xff] %v1185
  %1314 = vst [vmem:[%s3 + $0x1f4] sm:$0xf] %v1186
  %1315 = vst [vmem:[%s3 + $0x1f8] sm:$0xff] %v1187
  %1316 = vst [vmem:[%s3 + $0x200] sm:$0xf] %v1188
  %1317 = vst [vmem:[%s3 + $0x204] sm:$0xff] %v1189
  %1318 = vst [vmem:[%s3 + $0x20c] sm:$0xf] %v1190
  %1319 = vst [vmem:[%s3 + $0x210] sm:$0xff] %v1191
  %1320 = vst [vmem:[%s3 + $0x218] sm:$0xf] %v1192
  %1321 = vst [vmem:[%s3 + $0x21c] sm:$0xff] %v1193
  %1322 = vst [vmem:[%s3 + $0x224] sm:$0xf] %v1194
  %1323 = vst [vmem:[%s3 + $0x228] sm:$0xff] %v1195
  %1324 = vst [vmem:[%s3 + $0x230] sm:$0xf] %v1196
  %1325 = vst [vmem:[%s3 + $0x234] sm:$0xff] %v1197
  %1326 = vst [vmem:[%s3 + $0x23c] sm:$0xf] %v1198
  %1327 = vst [vmem:[%s3 + $0x240] sm:$0xff] %v1199
  %1328 = vst [vmem:[%s3 + $0x248] sm:$0xf] %v1200
  %1329 = vst [vmem:[%s3 + $0x24c] sm:$0xff] %v1201
  %1330 = vst [vmem:[%s3 + $0x254] sm:$0xf] %v1202
  %1331 = vst [vmem:[%s3 + $0x258] sm:$0xff] %v1203
  %1332 = vst [vmem:[%s3 + $0x260] sm:$0xf] %v1204
  %1333 = vst [vmem:[%s3 + $0x264] sm:$0xff] %v1205
  %1334 = vst [vmem:[%s3 + $0x26c] sm:$0xf] %v1206
  %1335 = vst [vmem:[%s3 + $0x270] sm:$0xff] %v1207
  %1336 = vst [vmem:[%s3 + $0x278] sm:$0xf] %v1208
  %1337 = vst [vmem:[%s3 + $0x27c] sm:$0xff] %v1209
  %1338 = vst [vmem:[%s3 + $0x284] sm:$0xf] %v1210
  %1339 = vst [vmem:[%s3 + $0x288] sm:$0xff] %v1211
  %1340 = vst [vmem:[%s3 + $0x290] sm:$0xf] %v1212
  %1341 = vst [vmem:[%s3 + $0x294] sm:$0xff] %v1213
  %1342 = vst [vmem:[%s3 + $0x29c] sm:$0xf] %v1214
  %1343 = vst [vmem:[%s3 + $0x2a0] sm:$0xff] %v1215
  %1344 = vst [vmem:[%s3 + $0x2a8] sm:$0xf] %v1216
  %1345 = vst [vmem:[%s3 + $0x2ac] sm:$0xff] %v1217
  %1346 = vst [vmem:[%s3 + $0x2b4] sm:$0xf] %v1218
  %1347 = vst [vmem:[%s3 + $0x2b8] sm:$0xff] %v1219
  %1348 = vst [vmem:[%s3 + $0x2c0] sm:$0xf] %v1220
  %1349 = vst [vmem:[%s3 + $0x2c4] sm:$0xff] %v1221
  %1350 = vst [vmem:[%s3 + $0x2cc] sm:$0xf] %v1222
  %1351 = vst [vmem:[%s3 + $0x2d0] sm:$0xff] %v1223
  %1352 = vst [vmem:[%s3 + $0x2d8] sm:$0xf] %v1224
  %1353 = vst [vmem:[%s3 + $0x2dc] sm:$0xff] %v1225
  %1354 = vst [vmem:[%s3 + $0x2e4] sm:$0xf] %v1226
  %1355 = vst [vmem:[%s3 + $0x2e8] sm:$0xff] %v1227
  %1356 = vst [vmem:[%s3 + $0x2f0] sm:$0xf] %v1228
  %1357 = vst [vmem:[%s3 + $0x2f4] sm:$0xff] %v1229
  %1358 = vst [vmem:[%s3 + $0x2fc] sm:$0xf] %v1230
  // Predicated region
  $region14: #{guided_refinement_forward.3} parent=0 // pred_check
    _
  $region15: #{guided_refinement_forward.3} parent=0 // pred_check_branch
    %1360 = sbr.rel (0) target = $region17
  $region16: #{guided_refinement_forward.3} parent=0 // pred_region
    _
  $region17: #{guided_refinement_forward.3} parent=0 // pred_fallthru
    _
  // Predicated region
  $region18: #{guided_refinement_forward.3} parent=0 // pred_check
    _
  $region19: #{guided_refinement_forward.3} parent=0 // pred_check_branch
    %1362 = sbr.rel (0) target = $region21
  $region20: #{guided_refinement_forward.3} parent=0 // pred_region
    _
  $region21: #{guided_refinement_forward.3} parent=0 // pred_fallthru
    _

// kernel: guided_refinement_forward.5
$region0: #{guided_refinement_forward.5}
  #allocation0 [shape = 'u32[]', space=smem, size = 0x4, offset = 0x4, fixed_abs, tag = 'smem constant byte address 0x4 - core index']
  #allocation1 [shape = 'u32[72,128]{1,0:T(1,128)}', space=vmem, size = 0x9000, scoped, tag = 'internal scratch']
  %s0 = inlined_call_operand.vmem [shape: bf16[512,36], index: 0, kind: input, shape index: {}]
  %s1 = inlined_call_operand.vmem [shape: bf16[36,128], index: 1, kind: input, shape index: {}]
  %s2 = inlined_call_operand.vmem [shape: f32[1,128], index: 2, kind: input, shape index: {}]
  %s3 = inlined_call_operand.vmem [shape: bf16[512,128], index: 3, kind: output, shape index: {}]
  %s4 = sld [smem:[#allocation0]]
  $region22: #{guided_refinement_forward.5} parent=0
    _
  %s6 = ssub.s32 1, %s4
  %s7 = scalar_select 0, %s6, %s4
  // Predicated region
  $region2: #{guided_refinement_forward.5} parent=0 // pred_check
    _
  $region3: #{guided_refinement_forward.5} parent=0 // pred_check_branch
    %9 = sbr.rel (0) target = $region5
  $region4: #{guided_refinement_forward.5} parent=0 // pred_region
    _
  $region5: #{guided_refinement_forward.5} parent=0 // pred_fallthru
    _
  // Predicated region
  $region6: #{guided_refinement_forward.5} parent=0 // pred_check
    _
  $region7: #{guided_refinement_forward.5} parent=0 // pred_check_branch
    %11 = sbr.rel (0) target = $region9
  $region8: #{guided_refinement_forward.5} parent=0 // pred_region
    _
  $region9: #{guided_refinement_forward.5} parent=0 // pred_fallthru
    _
  // Predicated region
  $region10: #{guided_refinement_forward.5} parent=0 // pred_check
    _
  $region11: #{guided_refinement_forward.5} parent=0 // pred_check_branch
    %13 = sbr.rel (0) target = $region13
  $region12: #{guided_refinement_forward.5} parent=0 // pred_region
    _
  $region13: #{guided_refinement_forward.5} parent=0 // pred_fallthru
    _
  %v15 = vld [vmem:[%s0] sm:$0xf]
  %v16 = vld [vmem:[%s0 + $0x4] sm:$0xf]
  %v17 = vld [vmem:[%s0 + $0x8] sm:$0xf]
  %v18 = vld [vmem:[%s0 + $0xc] sm:$0xf]
  %v19 = vld [vmem:[%s0 + $0x10] sm:$0xf]
  %v20 = vld [vmem:[%s0 + $0x14] sm:$0xf]
  %v21 = vld [vmem:[%s0 + $0x18] sm:$0xf]
  %v22 = vld [vmem:[%s0 + $0x1c] sm:$0xf]
  %v23 = vld [vmem:[%s0 + $0x20] sm:$0xf]
  %v24 = vld [vmem:[%s0 + $0x24] sm:$0xf]
  %v25 = vld [vmem:[%s0 + $0x28] sm:$0xf]
  %v26 = vld [vmem:[%s0 + $0x2c] sm:$0xf]
  %v27 = vld [vmem:[%s0 + $0x30] sm:$0xf]
  %v28 = vld [vmem:[%s0 + $0x34] sm:$0xf]
  %v29 = vld [vmem:[%s0 + $0x38] sm:$0xf]
  %v30 = vld [vmem:[%s0 + $0x3c] sm:$0xf]
  %v31 = vld [vmem:[%s0 + $0x40] sm:$0xf]
  %v32 = vld [vmem:[%s0 + $0x44] sm:$0xf]
  %v33 = vld [vmem:[%s0 + $0x48] sm:$0xf]
  %v34 = vld [vmem:[%s0 + $0x4c] sm:$0xf]
  %v35 = vld [vmem:[%s0 + $0x50] sm:$0xf]
  %v36 = vld [vmem:[%s0 + $0x54] sm:$0xf]
  %v37 = vld [vmem:[%s0 + $0x58] sm:$0xf]
  %v38 = vld [vmem:[%s0 + $0x5c] sm:$0xf]
  %v39 = vld [vmem:[%s0 + $0x60] sm:$0xf]
  %v40 = vld [vmem:[%s0 + $0x64] sm:$0xf]
  %v41 = vld [vmem:[%s0 + $0x68] sm:$0xf]
  %v42 = vld [vmem:[%s0 + $0x6c] sm:$0xf]
  %v43 = vld [vmem:[%s0 + $0x70] sm:$0xf]
  %v44 = vld [vmem:[%s0 + $0x74] sm:$0xf]
  %v45 = vld [vmem:[%s0 + $0x78] sm:$0xf]
  %v46 = vld [vmem:[%s0 + $0x7c] sm:$0xf]
  %v47 = vld [vmem:[%s0 + $0x80] sm:$0xf]
  %v48 = vld [vmem:[%s0 + $0x84] sm:$0xf]
  %v49 = vld [vmem:[%s0 + $0x88] sm:$0xf]
  %v50 = vld [vmem:[%s0 + $0x8c] sm:$0xf]
  %v51 = vld [vmem:[%s0 + $0x90] sm:$0xf]
  %v52 = vld [vmem:[%s0 + $0x94] sm:$0xf]
  %v53 = vld [vmem:[%s0 + $0x98] sm:$0xf]
  %v54 = vld [vmem:[%s0 + $0x9c] sm:$0xf]
  %v55 = vld [vmem:[%s0 + $0xa0] sm:$0xf]
  %v56 = vld [vmem:[%s0 + $0xa4] sm:$0xf]
  %v57 = vld [vmem:[%s0 + $0xa8] sm:$0xf]
  %v58 = vld [vmem:[%s0 + $0xac] sm:$0xf]
  %v59 = vld [vmem:[%s0 + $0xb0] sm:$0xf]
  %v60 = vld [vmem:[%s0 + $0xb4] sm:$0xf]
  %v61 = vld [vmem:[%s0 + $0xb8] sm:$0xf]
  %v62 = vld [vmem:[%s0 + $0xbc] sm:$0xf]
  %v63 = vld [vmem:[%s0 + $0xc0] sm:$0xf]
  %v64 = vld [vmem:[%s0 + $0xc4] sm:$0xf]
  %v65 = vld [vmem:[%s0 + $0xc8] sm:$0xf]
  %v66 = vld [vmem:[%s0 + $0xcc] sm:$0xf]
  %v67 = vld [vmem:[%s0 + $0xd0] sm:$0xf]
  %v68 = vld [vmem:[%s0 + $0xd4] sm:$0xf]
  %v69 = vld [vmem:[%s0 + $0xd8] sm:$0xf]
  %v70 = vld [vmem:[%s0 + $0xdc] sm:$0xf]
  %v71 = vld [vmem:[%s0 + $0xe0] sm:$0xf]
  %v72 = vld [vmem:[%s0 + $0xe4] sm:$0xf]
  %v73 = vld [vmem:[%s0 + $0xe8] sm:$0xf]
  %v74 = vld [vmem:[%s0 + $0xec] sm:$0xf]
  %v75 = vld [vmem:[%s0 + $0xf0] sm:$0xf]
  %v76 = vld [vmem:[%s0 + $0xf4] sm:$0xf]
  %v77 = vld [vmem:[%s0 + $0xf8] sm:$0xf]
  %v78 = vld [vmem:[%s0 + $0xfc] sm:$0xf]
  %v79 = vld [vmem:[%s1] sm:$0xf]
  %v80 = vld [vmem:[%s1 + $0x4] sm:$0xf]
  %v81 = vld [vmem:[%s1 + $0x8] sm:$0xf]
  %v82 = vld [vmem:[%s1 + $0xc] sm:$0xf]
  %v83 = vld [vmem:[%s1 + $0x10] sm:$0x3]
  %v84 = vld [vmem:[%s2] sm:$0x1]
  %v86 = vperm.slane %v84, 0
  %v152 = vunpack.c.l.b16 %v15
  %v153 = vunpack.c.l.b16 %v16
  %v154 = vunpack.c.l.b16 %v17
  %v155 = vunpack.c.l.b16 %v18
  %v156 = vunpack.c.l.b16 %v19
  %v157 = vunpack.c.l.b16 %v20
  %v158 = vunpack.c.l.b16 %v21
  %v159 = vunpack.c.l.b16 %v22
  %v160 = vunpack.c.l.b16 %v23
  %v161 = vunpack.c.l.b16 %v24
  %v162 = vunpack.c.l.b16 %v25
  %v163 = vunpack.c.l.b16 %v26
  %v164 = vunpack.c.l.b16 %v27
  %v165 = vunpack.c.l.b16 %v28
  %v166 = vunpack.c.l.b16 %v29
  %v167 = vunpack.c.l.b16 %v30
  %v168 = vunpack.c.l.b16 %v31
  %v169 = vunpack.c.l.b16 %v32
  %v170 = vunpack.c.l.b16 %v33
  %v171 = vunpack.c.l.b16 %v34
  %v172 = vunpack.c.l.b16 %v35
  %v173 = vunpack.c.l.b16 %v36
  %v174 = vunpack.c.l.b16 %v37
  %v175 = vunpack.c.l.b16 %v38
  %v176 = vunpack.c.l.b16 %v39
  %v177 = vunpack.c.l.b16 %v40
  %v178 = vunpack.c.l.b16 %v41
  %v179 = vunpack.c.l.b16 %v42
  %v180 = vunpack.c.l.b16 %v43
  %v181 = vunpack.c.l.b16 %v44
  %v182 = vunpack.c.l.b16 %v45
  %v183 = vunpack.c.l.b16 %v46
  %v184 = vunpack.c.l.b16 %v47
  %v185 = vunpack.c.l.b16 %v48
  %v186 = vunpack.c.l.b16 %v49
  %v187 = vunpack.c.l.b16 %v50
  %v188 = vunpack.c.l.b16 %v51
  %v189 = vunpack.c.l.b16 %v52
  %v190 = vunpack.c.l.b16 %v53
  %v191 = vunpack.c.l.b16 %v54
  %v192 = vunpack.c.l.b16 %v55
  %v193 = vunpack.c.l.b16 %v56
  %v194 = vunpack.c.l.b16 %v57
  %v195 = vunpack.c.l.b16 %v58
  %v196 = vunpack.c.l.b16 %v59
  %v197 = vunpack.c.l.b16 %v60
  %v198 = vunpack.c.l.b16 %v61
  %v199 = vunpack.c.l.b16 %v62
  %v200 = vunpack.c.l.b16 %v63
  %v201 = vunpack.c.l.b16 %v64
  %v202 = vunpack.c.l.b16 %v65
  %v203 = vunpack.c.l.b16 %v66
  %v204 = vunpack.c.l.b16 %v67
  %v205 = vunpack.c.l.b16 %v68
  %v206 = vunpack.c.l.b16 %v69
  %v207 = vunpack.c.l.b16 %v70
  %v208 = vunpack.c.l.b16 %v71
  %v209 = vunpack.c.l.b16 %v72
  %v210 = vunpack.c.l.b16 %v73
  %v211 = vunpack.c.l.b16 %v74
  %v212 = vunpack.c.l.b16 %v75
  %v213 = vunpack.c.l.b16 %v76
  %v214 = vunpack.c.l.b16 %v77
  %v215 = vunpack.c.l.b16 %v78
  %v216 = vpack.c.b16 %v153, %v152
  %v217 = vpack.c.b16 %v155, %v154
  %v218 = vpack.c.b16 %v157, %v156
  %v219 = vpack.c.b16 %v159, %v158
  %v220 = vpack.c.b16 %v161, %v160
  %v221 = vpack.c.b16 %v163, %v162
  %v222 = vpack.c.b16 %v165, %v164
  %v223 = vpack.c.b16 %v167, %v166
  %v224 = vpack.c.b16 %v169, %v168
  %v225 = vpack.c.b16 %v171, %v170
  %v226 = vpack.c.b16 %v173, %v172
  %v227 = vpack.c.b16 %v175, %v174
  %v228 = vpack.c.b16 %v177, %v176
  %v229 = vpack.c.b16 %v179, %v178
  %v230 = vpack.c.b16 %v181, %v180
  %v231 = vpack.c.b16 %v183, %v182
  %v232 = vpack.c.b16 %v185, %v184
  %v233 = vpack.c.b16 %v187, %v186
  %v234 = vpack.c.b16 %v189, %v188
  %v235 = vpack.c.b16 %v191, %v190
  %v236 = vpack.c.b16 %v193, %v192
  %v237 = vpack.c.b16 %v195, %v194
  %v238 = vpack.c.b16 %v197, %v196
  %v239 = vpack.c.b16 %v199, %v198
  %v240 = vpack.c.b16 %v201, %v200
  %v241 = vpack.c.b16 %v203, %v202
  %v242 = vpack.c.b16 %v205, %v204
  %v243 = vpack.c.b16 %v207, %v206
  %v244 = vpack.c.b16 %v209, %v208
  %v245 = vpack.c.b16 %v211, %v210
  %v246 = vpack.c.b16 %v213, %v212
  %v247 = vpack.c.b16 %v215, %v214
  %v253 = vunpack.c.l.b16 %v79
  %v254 = vunpack.c.l.b16 %v80
  %v255 = vunpack.c.l.b16 %v81
  %v256 = vunpack.c.l.b16 %v82
  %v257 = vunpack.c.l.b16 %v83
  %v258 = vpack.c.b16 %v254, %v253
  %v259 = vpack.c.b16 %v256, %v255
  %v260 = vpack.c.b16 %v257, %v257
  %vm263 = vcmask 293888
  %v265 = vsel %vm263, %v216, 0
  %v268 = vsel %vm263, %v217, 0
  %v271 = vsel %vm263, %v218, 0
  %v274 = vsel %vm263, %v219, 0
  %v277 = vsel %vm263, %v220, 0
  %v280 = vsel %vm263, %v221, 0
  %v283 = vsel %vm263, %v222, 0
  %v286 = vsel %vm263, %v223, 0
  %v289 = vsel %vm263, %v224, 0
  %v292 = vsel %vm263, %v225, 0
  %v295 = vsel %vm263, %v226, 0
  %v298 = vsel %vm263, %v227, 0
  %v301 = vsel %vm263, %v228, 0
  %v304 = vsel %vm263, %v229, 0
  %v307 = vsel %vm263, %v230, 0
  %v310 = vsel %vm263, %v231, 0
  %v313 = vsel %vm263, %v232, 0
  %v316 = vsel %vm263, %v233, 0
  %v319 = vsel %vm263, %v234, 0
  %v322 = vsel %vm263, %v235, 0
  %v325 = vsel %vm263, %v236, 0
  %v328 = vsel %vm263, %v237, 0
  %v331 = vsel %vm263, %v238, 0
  %v334 = vsel %vm263, %v239, 0
  %v337 = vsel %vm263, %v240, 0
  %v340 = vsel %vm263, %v241, 0
  %v343 = vsel %vm263, %v242, 0
  %v346 = vsel %vm263, %v243, 0
  %v349 = vsel %vm263, %v244, 0
  %v352 = vsel %vm263, %v245, 0
  %v355 = vsel %vm263, %v246, 0
  %v358 = vsel %vm263, %v247, 0
  %vm360 = vcmask 1041408
  %v362 = vsel %vm360, %v260, 0
  %364 = vmatpush.bf16.msra.mxu0 0
  %365 = vmatpush.bf16.msra.mxu0 0
  %366 = vmatpush.bf16.msra.mxu0 0
  %367 = vmatpush.bf16.msra.mxu0 0
  %368 = vmatpush.bf16.msra.mxu0 0
  %369 = vmatpush.bf16.msra.mxu0 %v362
  %370 = vmatpush.bf16.msra.mxu0 %v259
  %371 = vmatpush.bf16.msra.mxu0 %v258
  %372 = vmatmul.bf16.gmra.mxu0 %v265
  %v373 = vpop.f32.mrf.mxu0
  %v374 = vadd.f32 %v86, %v373
  %v375 = vpop.f32.mrf.mxu0
  %v376 = vadd.f32 %v86, %v375
  %377 = vmatmul.bf16.gmra.mxu0 %v268
  %v378 = vpop.f32.mrf.mxu0
  %v379 = vadd.f32 %v86, %v378
  %v380 = vpop.f32.mrf.mxu0
  %v381 = vadd.f32 %v86, %v380
  %382 = vmatmul.bf16.gmra.mxu0 %v271
  %v383 = vpop.f32.mrf.mxu0
  %v384 = vadd.f32 %v86, %v383
  %v385 = vpop.f32.mrf.mxu0
  %v386 = vadd.f32 %v86, %v385
  %387 = vmatmul.bf16.gmra.mxu0 %v274
  %v388 = vpop.f32.mrf.mxu0
  %v389 = vadd.f32 %v86, %v388
  %v390 = vpop.f32.mrf.mxu0
  %v391 = vadd.f32 %v86, %v390
  %392 = vmatmul.bf16.gmra.mxu0 %v277
  %v393 = vpop.f32.mrf.mxu0
  %v394 = vadd.f32 %v86, %v393
  %v395 = vpop.f32.mrf.mxu0
  %v396 = vadd.f32 %v86, %v395
  %397 = vmatmul.bf16.gmra.mxu0 %v280
  %v398 = vpop.f32.mrf.mxu0
  %v399 = vadd.f32 %v86, %v398
  %v400 = vpop.f32.mrf.mxu0
  %v401 = vadd.f32 %v86, %v400
  %402 = vmatmul.bf16.gmra.mxu0 %v283
  %v403 = vpop.f32.mrf.mxu0
  %v404 = vadd.f32 %v86, %v403
  %v405 = vpop.f32.mrf.mxu0
  %v406 = vadd.f32 %v86, %v405
  %407 = vmatmul.bf16.gmra.mxu0 %v286
  %v408 = vpop.f32.mrf.mxu0
  %v409 = vadd.f32 %v86, %v408
  %v410 = vpop.f32.mrf.mxu0
  %v411 = vadd.f32 %v86, %v410
  %412 = vmatmul.bf16.gmra.mxu0 %v289
  %v413 = vpop.f32.mrf.mxu0
  %v414 = vadd.f32 %v86, %v413
  %v415 = vpop.f32.mrf.mxu0
  %v416 = vadd.f32 %v86, %v415
  %417 = vmatmul.bf16.gmra.mxu0 %v292
  %v418 = vpop.f32.mrf.mxu0
  %v419 = vadd.f32 %v86, %v418
  %v420 = vpop.f32.mrf.mxu0
  %v421 = vadd.f32 %v86, %v420
  %422 = vmatmul.bf16.gmra.mxu0 %v295
  %v423 = vpop.f32.mrf.mxu0
  %v424 = vadd.f32 %v86, %v423
  %v425 = vpop.f32.mrf.mxu0
  %v426 = vadd.f32 %v86, %v425
  %427 = vmatmul.bf16.gmra.mxu0 %v298
  %v428 = vpop.f32.mrf.mxu0
  %v429 = vadd.f32 %v86, %v428
  %v430 = vpop.f32.mrf.mxu0
  %v431 = vadd.f32 %v86, %v430
  %432 = vmatmul.bf16.gmra.mxu0 %v301
  %v433 = vpop.f32.mrf.mxu0
  %v434 = vadd.f32 %v86, %v433
  %v435 = vpop.f32.mrf.mxu0
  %v436 = vadd.f32 %v86, %v435
  %437 = vmatmul.bf16.gmra.mxu0 %v304
  %v438 = vpop.f32.mrf.mxu0
  %v439 = vadd.f32 %v86, %v438
  %v440 = vpop.f32.mrf.mxu0
  %v441 = vadd.f32 %v86, %v440
  %442 = vmatmul.bf16.gmra.mxu0 %v307
  %v443 = vpop.f32.mrf.mxu0
  %v444 = vadd.f32 %v86, %v443
  %v445 = vpop.f32.mrf.mxu0
  %v446 = vadd.f32 %v86, %v445
  %447 = vmatmul.bf16.gmra.mxu0 %v310
  %v448 = vpop.f32.mrf.mxu0
  %v449 = vadd.f32 %v86, %v448
  %v450 = vpop.f32.mrf.mxu0
  %v451 = vadd.f32 %v86, %v450
  %452 = vmatmul.bf16.gmra.mxu0 %v313
  %v453 = vpop.f32.mrf.mxu0
  %v454 = vadd.f32 %v86, %v453
  %v455 = vpop.f32.mrf.mxu0
  %v456 = vadd.f32 %v86, %v455
  %457 = vmatmul.bf16.gmra.mxu0 %v316
  %v458 = vpop.f32.mrf.mxu0
  %v459 = vadd.f32 %v86, %v458
  %v460 = vpop.f32.mrf.mxu0
  %v461 = vadd.f32 %v86, %v460
  %462 = vmatmul.bf16.gmra.mxu0 %v319
  %v463 = vpop.f32.mrf.mxu0
  %v464 = vadd.f32 %v86, %v463
  %v465 = vpop.f32.mrf.mxu0
  %v466 = vadd.f32 %v86, %v465
  %467 = vmatmul.bf16.gmra.mxu0 %v322
  %v468 = vpop.f32.mrf.mxu0
  %v469 = vadd.f32 %v86, %v468
  %v470 = vpop.f32.mrf.mxu0
  %v471 = vadd.f32 %v86, %v470
  %472 = vmatmul.bf16.gmra.mxu0 %v325
  %v473 = vpop.f32.mrf.mxu0
  %v474 = vadd.f32 %v86, %v473
  %v475 = vpop.f32.mrf.mxu0
  %v476 = vadd.f32 %v86, %v475
  %477 = vmatmul.bf16.gmra.mxu0 %v328
  %v478 = vpop.f32.mrf.mxu0
  %v479 = vadd.f32 %v86, %v478
  %v480 = vpop.f32.mrf.mxu0
  %v481 = vadd.f32 %v86, %v480
  %482 = vmatmul.bf16.gmra.mxu0 %v331
  %v483 = vpop.f32.mrf.mxu0
  %v484 = vadd.f32 %v86, %v483
  %v485 = vpop.f32.mrf.mxu0
  %v486 = vadd.f32 %v86, %v485
  %487 = vmatmul.bf16.gmra.mxu0 %v334
  %v488 = vpop.f32.mrf.mxu0
  %v489 = vadd.f32 %v86, %v488
  %v490 = vpop.f32.mrf.mxu0
  %v491 = vadd.f32 %v86, %v490
  %492 = vmatmul.bf16.gmra.mxu0 %v337
  %v493 = vpop.f32.mrf.mxu0
  %v494 = vadd.f32 %v86, %v493
  %v495 = vpop.f32.mrf.mxu0
  %v496 = vadd.f32 %v86, %v495
  %497 = vmatmul.bf16.gmra.mxu0 %v340
  %v498 = vpop.f32.mrf.mxu0
  %v499 = vadd.f32 %v86, %v498
  %v500 = vpop.f32.mrf.mxu0
  %v501 = vadd.f32 %v86, %v500
  %502 = vmatmul.bf16.gmra.mxu0 %v343
  %v503 = vpop.f32.mrf.mxu0
  %v504 = vadd.f32 %v86, %v503
  %v505 = vpop.f32.mrf.mxu0
  %v506 = vadd.f32 %v86, %v505
  %507 = vmatmul.bf16.gmra.mxu0 %v346
  %v508 = vpop.f32.mrf.mxu0
  %v509 = vadd.f32 %v86, %v508
  %v510 = vpop.f32.mrf.mxu0
  %v511 = vadd.f32 %v86, %v510
  %512 = vmatmul.bf16.gmra.mxu0 %v349
  %v513 = vpop.f32.mrf.mxu0
  %v514 = vadd.f32 %v86, %v513
  %v515 = vpop.f32.mrf.mxu0
  %v516 = vadd.f32 %v86, %v515
  %517 = vmatmul.bf16.gmra.mxu0 %v352
  %v518 = vpop.f32.mrf.mxu0
  %v519 = vadd.f32 %v86, %v518
  %v520 = vpop.f32.mrf.mxu0
  %v521 = vadd.f32 %v86, %v520
  %522 = vmatmul.bf16.gmra.mxu0 %v355
  %v523 = vpop.f32.mrf.mxu0
  %v524 = vadd.f32 %v86, %v523
  %v525 = vpop.f32.mrf.mxu0
  %v526 = vadd.f32 %v86, %v525
  %527 = vmatmul.bf16.gmra.mxu0 %v358
  %v528 = vpop.f32.mrf.mxu0
  %v529 = vadd.f32 %v86, %v528
  %v530 = vpop.f32.mrf.mxu0
  %v531 = vadd.f32 %v86, %v530
  %532 = vdwg.mxu0
  %v533 = vmax.f32 %v374, 0.0
  %v534 = vmax.f32 %v376, 0.0
  %v535 = vmax.f32 %v379, 0.0
  %v536 = vmax.f32 %v381, 0.0
  %v537 = vmax.f32 %v384, 0.0
  %v538 = vmax.f32 %v386, 0.0
  %v539 = vmax.f32 %v389, 0.0
  %v540 = vmax.f32 %v391, 0.0
  %v541 = vmax.f32 %v394, 0.0
  %v542 = vmax.f32 %v396, 0.0
  %v543 = vmax.f32 %v399, 0.0
  %v544 = vmax.f32 %v401, 0.0
  %v545 = vmax.f32 %v404, 0.0
  %v546 = vmax.f32 %v406, 0.0
  %v547 = vmax.f32 %v409, 0.0
  %v548 = vmax.f32 %v411, 0.0
  %v549 = vmax.f32 %v414, 0.0
  %v550 = vmax.f32 %v416, 0.0
  %v551 = vmax.f32 %v419, 0.0
  %v552 = vmax.f32 %v421, 0.0
  %v553 = vmax.f32 %v424, 0.0
  %v554 = vmax.f32 %v426, 0.0
  %v555 = vmax.f32 %v429, 0.0
  %v556 = vmax.f32 %v431, 0.0
  %v557 = vmax.f32 %v434, 0.0
  %v558 = vmax.f32 %v436, 0.0
  %v559 = vmax.f32 %v439, 0.0
  %v560 = vmax.f32 %v441, 0.0
  %v561 = vmax.f32 %v444, 0.0
  %v562 = vmax.f32 %v446, 0.0
  %v563 = vmax.f32 %v449, 0.0
  %v564 = vmax.f32 %v451, 0.0
  %v565 = vmax.f32 %v454, 0.0
  %v566 = vmax.f32 %v456, 0.0
  %v567 = vmax.f32 %v459, 0.0
  %v568 = vmax.f32 %v461, 0.0
  %v569 = vmax.f32 %v464, 0.0
  %v570 = vmax.f32 %v466, 0.0
  %v571 = vmax.f32 %v469, 0.0
  %v572 = vmax.f32 %v471, 0.0
  %v573 = vmax.f32 %v474, 0.0
  %v574 = vmax.f32 %v476, 0.0
  %v575 = vmax.f32 %v479, 0.0
  %v576 = vmax.f32 %v481, 0.0
  %v577 = vmax.f32 %v484, 0.0
  %v578 = vmax.f32 %v486, 0.0
  %v579 = vmax.f32 %v489, 0.0
  %v580 = vmax.f32 %v491, 0.0
  %v581 = vmax.f32 %v494, 0.0
  %v582 = vmax.f32 %v496, 0.0
  %v583 = vmax.f32 %v499, 0.0
  %v584 = vmax.f32 %v501, 0.0
  %v585 = vmax.f32 %v504, 0.0
  %v586 = vmax.f32 %v506, 0.0
  %v587 = vmax.f32 %v509, 0.0
  %v588 = vmax.f32 %v511, 0.0
  %v589 = vmax.f32 %v514, 0.0
  %v590 = vmax.f32 %v516, 0.0
  %v591 = vmax.f32 %v519, 0.0
  %v592 = vmax.f32 %v521, 0.0
  %v593 = vmax.f32 %v524, 0.0
  %v594 = vmax.f32 %v526, 0.0
  %v595 = vmax.f32 %v529, 0.0
  %v596 = vmax.f32 %v531, 0.0
  %v597 = vpack.c.bf16 %v533, %v533
  %v598 = vpack.c.bf16 %v534, %v534
  %v599 = vpack.c.bf16 %v535, %v535
  %v600 = vpack.c.bf16 %v536, %v536
  %v601 = vpack.c.bf16 %v537, %v537
  %v602 = vpack.c.bf16 %v538, %v538
  %v603 = vpack.c.bf16 %v539, %v539
  %v604 = vpack.c.bf16 %v540, %v540
  %v605 = vpack.c.bf16 %v541, %v541
  %v606 = vpack.c.bf16 %v542, %v542
  %v607 = vpack.c.bf16 %v543, %v543
  %v608 = vpack.c.bf16 %v544, %v544
  %v609 = vpack.c.bf16 %v545, %v545
  %v610 = vpack.c.bf16 %v546, %v546
  %v611 = vpack.c.bf16 %v547, %v547
  %v612 = vpack.c.bf16 %v548, %v548
  %v613 = vpack.c.bf16 %v549, %v549
  %v614 = vpack.c.bf16 %v550, %v550
  %v615 = vpack.c.bf16 %v551, %v551
  %v616 = vpack.c.bf16 %v552, %v552
  %v617 = vpack.c.bf16 %v553, %v553
  %v618 = vpack.c.bf16 %v554, %v554
  %v619 = vpack.c.bf16 %v555, %v555
  %v620 = vpack.c.bf16 %v556, %v556
  %v621 = vpack.c.bf16 %v557, %v557
  %v622 = vpack.c.bf16 %v558, %v558
  %v623 = vpack.c.bf16 %v559, %v559
  %v624 = vpack.c.bf16 %v560, %v560
  %v625 = vpack.c.bf16 %v561, %v561
  %v626 = vpack.c.bf16 %v562, %v562
  %v627 = vpack.c.bf16 %v563, %v563
  %v628 = vpack.c.bf16 %v564, %v564
  %v629 = vpack.c.bf16 %v565, %v565
  %v630 = vpack.c.bf16 %v566, %v566
  %v631 = vpack.c.bf16 %v567, %v567
  %v632 = vpack.c.bf16 %v568, %v568
  %v633 = vpack.c.bf16 %v569, %v569
  %v634 = vpack.c.bf16 %v570, %v570
  %v635 = vpack.c.bf16 %v571, %v571
  %v636 = vpack.c.bf16 %v572, %v572
  %v637 = vpack.c.bf16 %v573, %v573
  %v638 = vpack.c.bf16 %v574, %v574
  %v639 = vpack.c.bf16 %v575, %v575
  %v640 = vpack.c.bf16 %v576, %v576
  %v641 = vpack.c.bf16 %v577, %v577
  %v642 = vpack.c.bf16 %v578, %v578
  %v643 = vpack.c.bf16 %v579, %v579
  %v644 = vpack.c.bf16 %v580, %v580
  %v645 = vpack.c.bf16 %v581, %v581
  %v646 = vpack.c.bf16 %v582, %v582
  %v647 = vpack.c.bf16 %v583, %v583
  %v648 = vpack.c.bf16 %v584, %v584
  %v649 = vpack.c.bf16 %v585, %v585
  %v650 = vpack.c.bf16 %v586, %v586
  %v651 = vpack.c.bf16 %v587, %v587
  %v652 = vpack.c.bf16 %v588, %v588
  %v653 = vpack.c.bf16 %v589, %v589
  %v654 = vpack.c.bf16 %v590, %v590
  %v655 = vpack.c.bf16 %v591, %v591
  %v656 = vpack.c.bf16 %v592, %v592
  %v657 = vpack.c.bf16 %v593, %v593
  %v658 = vpack.c.bf16 %v594, %v594
  %v659 = vpack.c.bf16 %v595, %v595
  %v660 = vpack.c.bf16 %v596, %v596
  %661 = vst [vmem:[%s3] sm:$0xf] %v597
  %662 = vst [vmem:[%s3 + $0x4] sm:$0xf] %v598
  %663 = vst [vmem:[%s3 + $0x8] sm:$0xf] %v599
  %664 = vst [vmem:[%s3 + $0xc] sm:$0xf] %v600
  %665 = vst [vmem:[%s3 + $0x10] sm:$0xf] %v601
  %666 = vst [vmem:[%s3 + $0x14] sm:$0xf] %v602
  %667 = vst [vmem:[%s3 + $0x18] sm:$0xf] %v603
  %668 = vst [vmem:[%s3 + $0x1c] sm:$0xf] %v604
  %669 = vst [vmem:[%s3 + $0x20] sm:$0xf] %v605
  %670 = vst [vmem:[%s3 + $0x24] sm:$0xf] %v606
  %671 = vst [vmem:[%s3 + $0x28] sm:$0xf] %v607
  %672 = vst [vmem:[%s3 + $0x2c] sm:$0xf] %v608
  %673 = vst [vmem:[%s3 + $0x30] sm:$0xf] %v609
  %674 = vst [vmem:[%s3 + $0x34] sm:$0xf] %v610
  %675 = vst [vmem:[%s3 + $0x38] sm:$0xf] %v611
  %676 = vst [vmem:[%s3 + $0x3c] sm:$0xf] %v612
  %677 = vst [vmem:[%s3 + $0x40] sm:$0xf] %v613
  %678 = vst [vmem:[%s3 + $0x44] sm:$0xf] %v614
  %679 = vst [vmem:[%s3 + $0x48] sm:$0xf] %v615
  %680 = vst [vmem:[%s3 + $0x4c] sm:$0xf] %v616
  %681 = vst [vmem:[%s3 + $0x50] sm:$0xf] %v617
  %682 = vst [vmem:[%s3 + $0x54] sm:$0xf] %v618
  %683 = vst [vmem:[%s3 + $0x58] sm:$0xf] %v619
  %684 = vst [vmem:[%s3 + $0x5c] sm:$0xf] %v620
  %685 = vst [vmem:[%s3 + $0x60] sm:$0xf] %v621
  %686 = vst [vmem:[%s3 + $0x64] sm:$0xf] %v622
  %687 = vst [vmem:[%s3 + $0x68] sm:$0xf] %v623
  %688 = vst [vmem:[%s3 + $0x6c] sm:$0xf] %v624
  %689 = vst [vmem:[%s3 + $0x70] sm:$0xf] %v625
  %690 = vst [vmem:[%s3 + $0x74] sm:$0xf] %v626
  %691 = vst [vmem:[%s3 + $0x78] sm:$0xf] %v627
  %692 = vst [vmem:[%s3 + $0x7c] sm:$0xf] %v628
  %693 = vst [vmem:[%s3 + $0x80] sm:$0xf] %v629
  %694 = vst [vmem:[%s3 + $0x84] sm:$0xf] %v630
  %695 = vst [vmem:[%s3 + $0x88] sm:$0xf] %v631
  %696 = vst [vmem:[%s3 + $0x8c] sm:$0xf] %v632
  %697 = vst [vmem:[%s3 + $0x90] sm:$0xf] %v633
  %698 = vst [vmem:[%s3 + $0x94] sm:$0xf] %v634
  %699 = vst [vmem:[%s3 + $0x98] sm:$0xf] %v635
  %700 = vst [vmem:[%s3 + $0x9c] sm:$0xf] %v636
  %701 = vst [vmem:[%s3 + $0xa0] sm:$0xf] %v637
  %702 = vst [vmem:[%s3 + $0xa4] sm:$0xf] %v638
  %703 = vst [vmem:[%s3 + $0xa8] sm:$0xf] %v639
  %704 = vst [vmem:[%s3 + $0xac] sm:$0xf] %v640
  %705 = vst [vmem:[%s3 + $0xb0] sm:$0xf] %v641
  %706 = vst [vmem:[%s3 + $0xb4] sm:$0xf] %v642
  %707 = vst [vmem:[%s3 + $0xb8] sm:$0xf] %v643
  %708 = vst [vmem:[%s3 + $0xbc] sm:$0xf] %v644
  %709 = vst [vmem:[%s3 + $0xc0] sm:$0xf] %v645
  %710 = vst [vmem:[%s3 + $0xc4] sm:$0xf] %v646
  %711 = vst [vmem:[%s3 + $0xc8] sm:$0xf] %v647
  %712 = vst [vmem:[%s3 + $0xcc] sm:$0xf] %v648
  %713 = vst [vmem:[%s3 + $0xd0] sm:$0xf] %v649
  %714 = vst [vmem:[%s3 + $0xd4] sm:$0xf] %v650
  %715 = vst [vmem:[%s3 + $0xd8] sm:$0xf] %v651
  %716 = vst [vmem:[%s3 + $0xdc] sm:$0xf] %v652
  %717 = vst [vmem:[%s3 + $0xe0] sm:$0xf] %v653
  %718 = vst [vmem:[%s3 + $0xe4] sm:$0xf] %v654
  %719 = vst [vmem:[%s3 + $0xe8] sm:$0xf] %v655
  %720 = vst [vmem:[%s3 + $0xec] sm:$0xf] %v656
  %721 = vst [vmem:[%s3 + $0xf0] sm:$0xf] %v657
  %722 = vst [vmem:[%s3 + $0xf4] sm:$0xf] %v658
  %723 = vst [vmem:[%s3 + $0xf8] sm:$0xf] %v659
  %724 = vst [vmem:[%s3 + $0xfc] sm:$0xf] %v660
  // Predicated region
  $region14: #{guided_refinement_forward.5} parent=0 // pred_check
    _
  $region15: #{guided_refinement_forward.5} parent=0 // pred_check_branch
    %726 = sbr.rel (0) target = $region17
  $region16: #{guided_refinement_forward.5} parent=0 // pred_region
    _
  $region17: #{guided_refinement_forward.5} parent=0 // pred_fallthru
    _
  // Predicated region
  $region18: #{guided_refinement_forward.5} parent=0 // pred_check
    _
  $region19: #{guided_refinement_forward.5} parent=0 // pred_check_branch
    %728 = sbr.rel (0) target = $region21
  $region20: #{guided_refinement_forward.5} parent=0 // pred_region
    _
  $region21: #{guided_refinement_forward.5} parent=0 // pred_fallthru
    _

</llo_original>
